<compile_context>
chip_gen: v5e
topology: v5e:2x2
jax: 0.10.0
libtpu: 0.0.40
codegen_flags: <defaults>
</compile_context>

<pallas_src>
import functools

import numpy as np
import jax
import jax.numpy as jnp
from jax.experimental import pallas as pl
from jax.experimental.pallas import tpu as pltpu

PRIMITIVES = ["skip", "conv", "conv_di", "conv_2x", "conv_2x_di"]
BN_EPS = 1e-5

_TARGET_M = 2048                    # target GEMM rows (output pixels) per grid step
_ACC_ELEMS = 32 * 1024              # f32 accumulator elems per chunk (~128 KiB)
_VMEM_BUDGET = 12 * 1024 * 1024     # per-step live-buffer budget (v7x headroom)
_VMEM_LIMIT = 32 * 1024 * 1024      # explicit scoped-VMEM limit


def _round_up(a, m):
    return (a + m - 1) // m * m


# ---------------------------------------------------------------------------
# Pallas kernel: 3x3 (dilated) conv + folded-BN bias + ReLU on one NHWC row block
# ---------------------------------------------------------------------------
def _make_conv3x3_kernel(th, wo, d, c_in, c_out_pad, cm):
    k3 = 3 * c_in
    m_main = th * wo
    m_halo = 2 * d * wo
    n_chunks = m_main // cm

    def kernel(xm_ref, xh_ref, w_ref, b_ref, o_ref, slab_ref):
        # xm_ref  : (1, th, WP, c_in)  bf16 -- current padded row block
        # xh_ref  : (1, 2*d, WP, c_in) bf16 -- bottom halo rows of this block
        # w_ref   : (3, 3*c_in, c_out_pad) bf16, BN scale folded, [kh, kw*c_in+ci, co]
        # b_ref   : (1, c_out_pad) f32 folded-BN bias
        # o_ref   : (1, th*wo, c_out_pad) bf16
        # slab_ref: ((th+2d)*wo, 3*c_in) bf16 scratch: kw-shifted, channel-packed rows
        xm = xm_ref[0]
        xh = xh_ref[0]
        # slab[r*wo + c, kw*c_in + ci] = x_pad[r, c + kw*d, ci]
        m3 = jnp.concatenate([xm[:, kw * d:kw * d + wo, :] for kw in range(3)],
                             axis=-1)
        slab_ref[0:m_main, :] = m3.reshape(m_main, k3)
        h3 = jnp.concatenate([xh[:, kw * d:kw * d + wo, :] for kw in range(3)],
                             axis=-1)
        slab_ref[m_main:m_main + m_halo, :] = h3.reshape(m_halo, k3)

        bias = b_ref[...]                            # (1, c_out_pad) f32
        ws = [w_ref[k] for k in range(3)]            # 3 x (3*c_in, c_out_pad) bf16

        def chunk_body(ci, carry):
            row0 = pl.multiple_of(ci * cm, cm)
            acc = jnp.zeros((cm, c_out_pad), jnp.float32)
            for kh in range(3):                      # free, aligned row-slice views
                lhs = slab_ref[pl.ds(row0 + kh * d * wo, cm), :]
                acc = acc + jnp.dot(lhs, ws[kh],
                                    preferred_element_type=jnp.float32)
            out = jnp.maximum(acc + bias, 0.0)
            o_ref[0, pl.ds(row0, cm), :] = out.astype(o_ref.dtype)
            return carry

        jax.lax.fori_loop(0, n_chunks, chunk_body, 0, unroll=(n_chunks <= 8))

    return kernel


def _conv3x3_bn_relu(x_nchw, w_k, bias_p, *, dilation, C_out):
    """Stride-1 3x3 (optionally dilated) conv + folded BN + ReLU.  NCHW f32 in/out."""
    N, C_in, H, W = x_nchw.shape
    d = dilation
    c_out_pad = w_k.shape[-1]
    Ho, Wo = H, W                        # stride 1, 'same' padding
    wo_pad = _round_up(Wo, 16)           # bf16 sublane-aligned (free flatten reshape)
    WP = wo_pad + 2 * d                  # padded input width
    step = 2 * d                         # halo rows / row-tile quantum

    def vmem_est(th_):
        in_blk = th_ * WP * C_in * 2
        halo_blk = step * WP * C_in * 2
        w_blk = 9 * C_in * c_out_pad * 2
        b_blk = c_out_pad * 4
        out_blk = th_ * wo_pad * c_out_pad * 2
        slab = (th_ + step) * wo_pad * 3 * C_in * 2
        return (2 * (in_blk + halo_blk + w_blk + b_blk + out_blk)
                + 2 * slab + (256 << 10))

    # Row tile: ~_TARGET_M output pixels per step, multiple of 2*d (halo alignment).
    th = max(step, (_TARGET_M // wo_pad) // step * step)
    th = min(th, _round_up(Ho, step))
    if N == 1 and Ho > step:             # keep both v7x TensorCores fed when N == 1
        th = min(th, max(step, _round_up(-(-Ho // 2), step)))
    while th > step and vmem_est(th) > _VMEM_BUDGET:
        th = max(step, (th // 2) // step * step)
    nhb = -(-Ho // th)                   # cdiv
    hs = th // step                      # halo block-index stride

    # Chunk rows so the f32 accumulator stays ~<= 128 KiB (resident in vregs).
    rpc = max(1, min(th, (_ACC_ELEMS // max(c_out_pad, 1)) // wo_pad))
    while th % rpc:
        rpc -= 1
    cm = rpc * wo_pad

    # Single boundary conversion: NCHW f32 -> padded NHWC bf16 (fused by XLA).
    # TODO(synk): fold the zero padding / layout change into the kernel and keep
    # activations NHWC-bf16 between MixedOps so this runs once per network.
    HP = nhb * th + step                 # exactly nhb*th rows + 2*d halo rows
    x = jnp.transpose(x_nchw, (0, 2, 3, 1)).astype(jnp.bfloat16)
    x = jnp.pad(x, ((0, 0), (d, HP - H - d), (d, WP - W - d), (0, 0)))

    kernel = _make_conv3x3_kernel(th, wo_pad, d, C_in, c_out_pad, cm)
    out = pl.pallas_call(
        kernel,
        out_shape=jax.ShapeDtypeStruct((N, nhb * th * wo_pad, c_out_pad),
                                       jnp.bfloat16),
        grid_spec=pltpu.PrefetchScalarGridSpec(
            num_scalar_prefetch=0,
            grid=(N, nhb),
            in_specs=[
                # current row block
                pl.BlockSpec((1, th, WP, C_in), lambda n, h: (n, h, 0, 0)),
                # bottom halo: only the 2*d rows below the block
                pl.BlockSpec((1, step, WP, C_in),
                             lambda n, h: (n, (h + 1) * hs, 0, 0)),
                # resident packed weights [kh, kw*C_in+ci, co]
                pl.BlockSpec((3, 3 * C_in, c_out_pad), lambda n, h: (0, 0, 0)),
                # folded BN bias
                pl.BlockSpec((1, c_out_pad), lambda n, h: (0, 0)),
            ],
            out_specs=pl.BlockSpec((1, th * wo_pad, c_out_pad),
                                   lambda n, h: (n, h, 0)),
            scratch_shapes=[
                pltpu.VMEM(((th + step) * wo_pad, 3 * C_in), jnp.bfloat16),
            ],
        ),
        compiler_params=pltpu.CompilerParams(
            dimension_semantics=("parallel", "parallel"),
            vmem_limit_bytes=_VMEM_LIMIT),
    )(x, x, w_k, bias_p)

    # Metadata reshape + fused slice/transpose/cast back to NCHW f32 (PyTorch parity).
    out = out.reshape(N, nhb * th, wo_pad, c_out_pad)[:, :Ho, :Wo, :C_out]
    return jnp.transpose(out, (0, 3, 1, 2)).astype(jnp.float32)


# ---------------------------------------------------------------------------
# MixedOp wrapper
# ---------------------------------------------------------------------------
class MixedOpPallas:
    """JAX/Pallas equivalent of MixedOp(C_in, C_out, op_idx, stride)."""

    def __init__(self, C_in, C_out, op_idx, stride=1, key=None):
        self.prim = PRIMITIVES[op_idx]
        self.C_in, self.C_out, self.stride = C_in, C_out, stride
        key = jax.random.PRNGKey(42) if key is None else key

        if self.prim == "skip":
            if stride != 1 or C_in != C_out:
                # TODO(synk): FactorizedReduce (stride-2 skip) not implemented.
                raise NotImplementedError("skip requires stride=1, C_in==C_out here")
            self.params = None
        elif self.prim in ("conv", "conv_di"):
            if stride != 1:
                # TODO(synk): stride-2 ConvNorm not implemented in the Pallas path.
                raise NotImplementedError("only stride=1 ConvNorm implemented")
            self.ksize = 3
            self.dilation = 1 if self.prim == "conv" else 2
            self.padding = self.dilation            # 'same' spatial size at stride 1
            fan_in = C_in * self.ksize * self.ksize
            w = jax.random.normal(key, (C_out, C_in, 3, 3), jnp.float32) * np.sqrt(
                2.0 / fan_in)
            # BatchNorm2d (eval mode): gamma=1, beta=0, running_mean=0, running_var=1
            gamma = jnp.ones((C_out,), jnp.float32)
            beta = jnp.zeros((C_out,), jnp.float32)
            r_mean = jnp.zeros((C_out,), jnp.float32)
            r_var = jnp.ones((C_out,), jnp.float32)
            scale = gamma / jnp.sqrt(r_var + BN_EPS)
            bias = beta - r_mean * scale

            # Fold BN scale into the conv weights, quantize operands to bf16.
            w_folded = (w * scale[:, None, None, None]).astype(jnp.bfloat16)

            # Lane-pad C_out only when it pays for itself (crossover ~C_out >= 64);
            # small FasterSeg widths stay unpadded to keep output HBM bytes small.
            c_out_pad = C_out if C_out < 64 else _round_up(C_out, 128)
            # Pack OIHW -> [kh, kw*C_in + ci, co]: K = 3*C_in per kh matmul.
            w_k = jnp.transpose(w_folded, (2, 3, 1, 0)).reshape(3, 3 * C_in, C_out)
            w_k = jnp.pad(w_k, ((0, 0), (0, 0), (0, c_out_pad - C_out)))
            bias_p = jnp.pad(bias, (0, c_out_pad - C_out)).reshape(1, c_out_pad)

            self.params = dict(
                w_k=w_k,                                  # (3, 3*C_in, C_out_pad) bf16
                bias_p=bias_p.astype(jnp.float32),        # (1, C_out_pad) f32
                w_ref=w_folded.astype(jnp.float32),       # reference copy (OIHW f32)
                bias_ref=bias,                            # reference copy (C_out,)
            )
            self._fwd = jax.jit(functools.partial(
                _conv3x3_bn_relu, dilation=self.dilation, C_out=C_out))
        else:
            # TODO(synk): BasicResidual2x ('conv_2x', 'conv_2x_di') not implemented
            #             (would fuse both ConvNorms into one pallas_call with the
            #             intermediate kept in VMEM).
            raise NotImplementedError(f"primitive {self.prim} not implemented")

    def __call__(self, x):
        # x: (N, C_in, H, W) float32, NCHW like PyTorch.
        if self.prim == "skip":
            return x
        return self._fwd(x, self.params["w_k"], self.params["bias_p"])


# ---------------------------------------------------------------------------
def _reference_conv_bn_relu(x, op):
    """Pure-JAX reference (lax conv in f32, same bf16-rounded operands)."""
    x_q = x.astype(jnp.bfloat16).astype(jnp.float32)
    y = jax.lax.conv_general_dilated(
        x_q, op.params["w_ref"],
        window_strides=(op.stride, op.stride),
        padding=[(op.padding, op.padding)] * 2,
        rhs_dilation=(op.dilation, op.dilation),
        dimension_numbers=("NCHW", "OIHW", "NCHW"),
        precision=jax.lax.Precision.HIGHEST)
    bias = op.params["bias_ref"].reshape(1, -1, 1, 1)
    return jnp.maximum(y + bias, 0.0)


if __name__ == "__main__":
    key = jax.random.PRNGKey(0)
    kx, kw = jax.random.split(key)

    N, C_in, H, W = 2, 4, 16, 16
    C_out = 8

    x = jax.random.normal(kx, (N, C_in, H, W), jnp.float32)

    # op_idx=1 -> 'conv' (ConvNorm 3x3), op_idx=2 -> 'conv_di' (dilated 3x3).
    for op_idx in (1, 2):
        op = MixedOpPallas(C_in, C_out, op_idx, stride=1, key=kw)
        y = jax.block_until_ready(op(x))
        y_ref = _reference_conv_bn_relu(x, op)
        np.testing.assert_allclose(np.asarray(y), np.asarray(y_ref),
                                   rtol=2e-2, atol=2e-2)
        assert y.shape == (N, C_out, H, W)

    # op_idx=0 -> 'skip' (identity).
    op_skip = MixedOpPallas(C_in, C_in, 0, stride=1, key=kw)
    y_skip = jax.block_until_ready(op_skip(x))
    np.testing.assert_allclose(np.asarray(y_skip), np.asarray(x))

    print("KERNEL_OK")
</pallas_src>

<mosaic_0001>
module attributes {stable_mosaic.version = 11 : i64} {
  func.func @kernel(%arg0: i32, %arg1: i32, %arg2: memref<1x16x18x4xbf16, #tpu.memory_space<vmem>>, %arg3: memref<1x2x18x4xbf16, #tpu.memory_space<vmem>>, %arg4: memref<3x12x8xbf16, #tpu.memory_space<vmem>>, %arg5: memref<1x8xf32, #tpu.memory_space<vmem>>, %arg6: memref<1x256x8xbf16, #tpu.memory_space<vmem>>, %arg7: memref<288x12xbf16, #tpu.memory_space<vmem>>) attributes {dimension_semantics = [#tpu.dimension_semantics<parallel>, #tpu.dimension_semantics<parallel>], iteration_bounds = array<i64: 2, 1>, scalar_prefetch = 0 : i64, scratch_operands = 1 : i64, tpu.core_type = #tpu.core_type<tc>, window_params = [{transform_indices = @transform_0, window_bounds = array<i64: 1, 16, 18, 4>}, {transform_indices = @transform_1, window_bounds = array<i64: 1, 2, 18, 4>}, {pipeline_mode = #tpu.pipeline_mode<synchronous>, transform_indices = @transform_2, window_bounds = array<i64: 3, 12, 8>}, {pipeline_mode = #tpu.pipeline_mode<synchronous>, transform_indices = @transform_3, window_bounds = array<i64: 1, 8>}, {transform_indices = @transform_4, window_bounds = array<i64: 1, 256, 8>}]} {
    %c0 = arith.constant 0 : index
    %c0_0 = arith.constant 0 : index
    %c0_1 = arith.constant 0 : index
    %c0_2 = arith.constant 0 : index
    %0 = vector.load %arg2[%c0, %c0_0, %c0_1, %c0_2] : memref<1x16x18x4xbf16, #tpu.memory_space<vmem>>, vector<1x16x18x4xbf16>
    %1 = vector.shape_cast %0 : vector<1x16x18x4xbf16> to vector<16x18x4xbf16>
    %c0_3 = arith.constant 0 : index
    %c0_4 = arith.constant 0 : index
    %c0_5 = arith.constant 0 : index
    %c0_6 = arith.constant 0 : index
    %2 = vector.load %arg3[%c0_3, %c0_4, %c0_5, %c0_6] : memref<1x2x18x4xbf16, #tpu.memory_space<vmem>>, vector<1x2x18x4xbf16>
    %3 = vector.shape_cast %2 : vector<1x2x18x4xbf16> to vector<2x18x4xbf16>
    %4 = vector.extract_strided_slice %1 {offsets = [0, 0, 0], sizes = [16, 16, 4], strides = [1, 1, 1]} : vector<16x18x4xbf16> to vector<16x16x4xbf16>
    %5 = vector.extract_strided_slice %1 {offsets = [0, 1, 0], sizes = [16, 16, 4], strides = [1, 1, 1]} : vector<16x18x4xbf16> to vector<16x16x4xbf16>
    %6 = vector.extract_strided_slice %1 {offsets = [0, 2, 0], sizes = [16, 16, 4], strides = [1, 1, 1]} : vector<16x18x4xbf16> to vector<16x16x4xbf16>
    %7 = tpu.concatenate %4, %5, %6 in 2 : vector<16x16x4xbf16>, vector<16x16x4xbf16>, vector<16x16x4xbf16> -> vector<16x16x12xbf16>
    %8 = vector.shape_cast %7 : vector<16x16x12xbf16> to vector<256x12xbf16>
    %c0_7 = arith.constant 0 : index
    %c0_8 = arith.constant 0 : index
    %9 = vector.load %arg7[%c0_7, %c0_8] : memref<288x12xbf16, #tpu.memory_space<vmem>>, vector<256x12xbf16>
    tpu.vector_store %arg7[%c0_7, %c0_8], %8 {strides = array<i32>} : memref<288x12xbf16, #tpu.memory_space<vmem>>, vector<256x12xbf16>,
    %10 = vector.extract_strided_slice %3 {offsets = [0, 0, 0], sizes = [2, 16, 4], strides = [1, 1, 1]} : vector<2x18x4xbf16> to vector<2x16x4xbf16>
    %11 = vector.extract_strided_slice %3 {offsets = [0, 1, 0], sizes = [2, 16, 4], strides = [1, 1, 1]} : vector<2x18x4xbf16> to vector<2x16x4xbf16>
    %12 = vector.extract_strided_slice %3 {offsets = [0, 2, 0], sizes = [2, 16, 4], strides = [1, 1, 1]} : vector<2x18x4xbf16> to vector<2x16x4xbf16>
    %13 = tpu.concatenate %10, %11, %12 in 2 : vector<2x16x4xbf16>, vector<2x16x4xbf16>, vector<2x16x4xbf16> -> vector<2x16x12xbf16>
    %14 = vector.shape_cast %13 : vector<2x16x12xbf16> to vector<32x12xbf16>
    %c256 = arith.constant 256 : index
    %c0_9 = arith.constant 0 : index
    %15 = vector.load %arg7[%c256, %c0_9] : memref<288x12xbf16, #tpu.memory_space<vmem>>, vector<32x12xbf16>
    tpu.vector_store %arg7[%c256, %c0_9], %14 {strides = array<i32>} : memref<288x12xbf16, #tpu.memory_space<vmem>>, vector<32x12xbf16>,
    %c0_10 = arith.constant 0 : index
    %c0_11 = arith.constant 0 : index
    %16 = vector.load %arg5[%c0_10, %c0_11] : memref<1x8xf32, #tpu.memory_space<vmem>>, vector<1x8xf32>
    %c0_12 = arith.constant 0 : index
    %c0_13 = arith.constant 0 : index
    %c0_14 = arith.constant 0 : index
    %17 = vector.load %arg4[%c0_12, %c0_13, %c0_14] : memref<3x12x8xbf16, #tpu.memory_space<vmem>>, vector<1x12x8xbf16>
    %18 = vector.shape_cast %17 : vector<1x12x8xbf16> to vector<12x8xbf16>
    %c1 = arith.constant 1 : index
    %c0_15 = arith.constant 0 : index
    %c0_16 = arith.constant 0 : index
    %19 = vector.load %arg4[%c1, %c0_15, %c0_16] : memref<3x12x8xbf16, #tpu.memory_space<vmem>>, vector<1x12x8xbf16>
    %20 = vector.shape_cast %19 : vector<1x12x8xbf16> to vector<12x8xbf16>
    %c2 = arith.constant 2 : index
    %c0_17 = arith.constant 0 : index
    %c0_18 = arith.constant 0 : index
    %21 = vector.load %arg4[%c2, %c0_17, %c0_18] : memref<3x12x8xbf16, #tpu.memory_space<vmem>>, vector<1x12x8xbf16>
    %22 = vector.shape_cast %21 : vector<1x12x8xbf16> to vector<12x8xbf16>
    %c0_i32 = arith.constant 0 : i32
    %c256_i32 = arith.constant 256 : i32
    %23 = arith.muli %c0_i32, %c256_i32 : i32
    %24 = tpu.assume_multiple %23, 256 : i32
    %cst = arith.constant 0.000000e+00 : f32
    %25 = vector.broadcast %cst : f32 to vector<256x8xf32>
    %c0_i32_19 = arith.constant 0 : i32
    %26 = arith.addi %24, %c0_i32_19 : i32
    %27 = arith.index_cast %26 : i32 to index
    %c0_20 = arith.constant 0 : index
    %28 = vector.load %arg7[%27, %c0_20] : memref<288x12xbf16, #tpu.memory_space<vmem>>, vector<256x12xbf16>
    %cst_21 = arith.constant dense<0.000000e+00> : vector<256x8xf32>
    %29 = tpu.matmul %28, %18, %cst_21 {dimension_numbers = #tpu.dot_dimension_numbers<[1], [0], [0], [1], [0, 0, 1, 1], [], []>} : vector<256x12xbf16>, vector<12x8xbf16>, vector<256x8xf32> -> vector<256x8xf32>
    %30 = arith.addf %25, %29 : vector<256x8xf32>
    %c16_i32 = arith.constant 16 : i32
    %31 = arith.addi %24, %c16_i32 : i32
    %32 = arith.index_cast %31 : i32 to index
    %c0_22 = arith.constant 0 : index
    %33 = vector.load %arg7[%32, %c0_22] : memref<288x12xbf16, #tpu.memory_space<vmem>>, vector<256x12xbf16>
    %cst_23 = arith.constant dense<0.000000e+00> : vector<256x8xf32>
    %34 = tpu.matmul %33, %20, %cst_23 {dimension_numbers = #tpu.dot_dimension_numbers<[1], [0], [0], [1], [0, 0, 1, 1], [], []>} : vector<256x12xbf16>, vector<12x8xbf16>, vector<256x8xf32> -> vector<256x8xf32>
    %35 = arith.addf %30, %34 : vector<256x8xf32>
    %c32_i32 = arith.constant 32 : i32
    %36 = arith.addi %24, %c32_i32 : i32
    %37 = arith.index_cast %36 : i32 to index
    %c0_24 = arith.constant 0 : index
    %38 = vector.load %arg7[%37, %c0_24] : memref<288x12xbf16, #tpu.memory_space<vmem>>, vector<256x12xbf16>
    %cst_25 = arith.constant dense<0.000000e+00> : vector<256x8xf32>
    %39 = tpu.matmul %38, %22, %cst_25 {dimension_numbers = #tpu.dot_dimension_numbers<[1], [0], [0], [1], [0, 0, 1, 1], [], []>} : vector<256x12xbf16>, vector<12x8xbf16>, vector<256x8xf32> -> vector<256x8xf32>
    %40 = arith.addf %35, %39 : vector<256x8xf32>
    %41 = vector.broadcast %16 : vector<1x8xf32> to vector<256x8xf32>
    %42 = arith.addf %40, %41 : vector<256x8xf32>
    %cst_26 = arith.constant 0.000000e+00 : f32
    %43 = vector.broadcast %cst_26 : f32 to vector<256x8xf32>
    %44 = arith.maximumf %42, %43 : vector<256x8xf32>
    %45 = arith.truncf %44 : vector<256x8xf32> to vector<256x8xbf16>
    %c0_27 = arith.constant 0 : index
    %46 = arith.index_cast %24 : i32 to index
    %c0_28 = arith.constant 0 : index
    %47 = vector.load %arg6[%c0_27, %46, %c0_28] : memref<1x256x8xbf16, #tpu.memory_space<vmem>>, vector<1x256x8xbf16>
    %48 = vector.shape_cast %47 : vector<1x256x8xbf16> to vector<256x8xbf16>
    %49 = vector.shape_cast %45 : vector<256x8xbf16> to vector<1x256x8xbf16>
    tpu.vector_store %arg6[%c0_27, %46, %c0_28], %49 {strides = array<i32>} : memref<1x256x8xbf16, #tpu.memory_space<vmem>>, vector<1x256x8xbf16>,
    %c1_i32 = arith.constant 1 : i32
    return
  }
  func.func @transform_0(%arg0: i32, %arg1: i32) -> (i32, i32, i32, i32) {
    %c0_i32 = arith.constant 0 : i32
    %c0_i32_0 = arith.constant 0 : i32
    %c0_i32_1 = arith.constant 0 : i32
    return %arg0, %arg1, %c0_i32, %c0_i32_0 : i32, i32, i32, i32
  }
  func.func @transform_1(%arg0: i32, %arg1: i32) -> (i32, i32, i32, i32) {
    %c1_i32 = arith.constant 1 : i32
    %0 = arith.addi %arg1, %c1_i32 : i32
    %c8_i32 = arith.constant 8 : i32
    %1 = arith.muli %0, %c8_i32 : i32
    %c0_i32 = arith.constant 0 : i32
    %c0_i32_0 = arith.constant 0 : i32
    %c0_i32_1 = arith.constant 0 : i32
    return %arg0, %1, %c0_i32, %c0_i32_0 : i32, i32, i32, i32
  }
  func.func @transform_2(%arg0: i32, %arg1: i32) -> (i32, i32, i32) {
    %c0_i32 = arith.constant 0 : i32
    %c0_i32_0 = arith.constant 0 : i32
    %c0_i32_1 = arith.constant 0 : i32
    %c0_i32_2 = arith.constant 0 : i32
    return %c0_i32, %c0_i32_0, %c0_i32_1 : i32, i32, i32
  }
  func.func @transform_3(%arg0: i32, %arg1: i32) -> (i32, i32) {
    %c0_i32 = arith.constant 0 : i32
    %c0_i32_0 = arith.constant 0 : i32
    %c0_i32_1 = arith.constant 0 : i32
    return %c0_i32, %c0_i32_0 : i32, i32
  }
  func.func @transform_4(%arg0: i32, %arg1: i32) -> (i32, i32, i32) {
    %c0_i32 = arith.constant 0 : i32
    %c0_i32_0 = arith.constant 0 : i32
    return %arg0, %arg1, %c0_i32 : i32, i32, i32
  }
}

</mosaic_0001>

<llo_original>
// kernel: _conv3x3_bn_relu.1
$region0: #{_conv3x3_bn_relu.1}
  #allocation0 [shape = 'u32[]', space=smem, size = 0x4, offset = 0x4, fixed_abs, tag = 'smem constant byte address 0x4 - core index']
  #allocation1 [shape = 'u32[72,128]{1,0:T(1,128)}', space=vmem, size = 0x9000, scoped, tag = 'internal scratch']
  #allocation2 [shape = 'bf16[288,12]{1,0:T(8,128)(2,1)}', space=vmem, size = 0x12000, scoped, tag = 'scratch operand']
  %s0 = inlined_call_operand.vmem [shape: bf16[2,18,18,4], index: 0, kind: input, shape index: {}, may-alias: {0,1}]
  %s1 = inlined_call_operand.vmem [shape: bf16[2,18,18,4], index: 1, kind: input, shape index: {}, may-alias: {0,1}]
  %s2 = inlined_call_operand.vmem [shape: bf16[3,12,8], index: 2, kind: input, shape index: {}]
  %s3 = inlined_call_operand.vmem [shape: f32[1,8], index: 3, kind: input, shape index: {}]
  %s4 = inlined_call_operand.vmem [shape: bf16[2,256,8], index: 4, kind: output, shape index: {}]
  %s5 = sld [smem:[#allocation0]]
  $region49: #{_conv3x3_bn_relu.1} parent=0
    _
  %s7 = ssub.s32 1, %s5
  %s8 = scalar_select 0, %s7, %s5
  loop: start=0, step=1, limit=4
  $region2: #{_conv3x3_bn_relu.1} parent=0 // loop_pre_header
    _
  $region3: #{_conv3x3_bn_relu.1} parent=0 // loop_header
    %s10 = sphi 0, %s14
    %p11 = scmp.ge.s32.totalorder %s10, 4
    %s17 = sphi 0, %s29
    %s18 = sphi 0, %s25
    %s19 = sphi 0, %s17
    %s20 = sphi 0, %s18
    %s21 = sphi 0, %s19
    %s22 = sphi 0, %s20
    %s34 = sphi 0, %s36
    %s37 = sphi 0, %s34
    %s38 = sphi 0, %s37
    %s54 = sphi 0, %s38
    %s66 = sphi 0, %s68
    %s69 = sphi 0, %s66
    %s70 = sphi 0, %s69
    %s86 = sphi 0, %s70
    %s90 = sphi 0, %s90
    %s92 = sphi 0, %s90
    %s93 = sphi 0, %s92
    %s107 = sphi 0, %s93
    %s111 = sphi 0, %s111
    %s113 = sphi 0, %s111
    %s114 = sphi 0, %s113
    %s128 = sphi 0, %s114
    %s136 = sphi 0, %s138
    %s139 = sphi 0, %s136
    %s140 = sphi 0, %s139
    %s156 = sphi 0, %s140
  $region4: #{_conv3x3_bn_relu.1} parent=0 // loop_header_branch
    %13 = sbr.rel (%p11) target = $region8
  $region5: #{_conv3x3_bn_relu.1} parent=0 // loop_body
    %s15 = ssub.s32 %s10, 1
    %s16 = ssub.s32 %s10, 2
    %s23 = sadd.s32 1, %s18
    %p24 = scmp.ge.s32.totalorder %s23, 1
    %s25 = scalar_select %p24, 0, %s23
    %s26 = sadd.s32 1, %s17
    %s27 = scalar_select %p24, %s26, %s17
    %p28 = scmp.ge.s32.totalorder %s27, 2
    %s29 = scalar_select %p28, 0, %s27
    %s30 = ssub.s32 %s17, %s29
    %s31 = ssub.s32 %s18, %s25
    %s32 = sor.u32 %s30, %s31
    %p33 = scmp.eq.s32.totalorder %s32, 0
    %s35 = sadd.s32 %s34, 1
    %s36 = scalar_select %p33, %s34, %s35
    %p39 = pneg %p33
    %p40 = scmp.eq.s32.totalorder %s10, 1
    %p41 = por %p39, %p40
    %p42 = scmp.ne.s32.totalorder %s34, %s37
    %p43 = scmp.eq.s32.totalorder %s10, 0
    %p44 = por %p42, %p43
    %p45 = scmp.ne.s32.totalorder %s34, %s37
    %p46 = scmp.eq.s32.totalorder %s15, 1
    %p47 = por %p45, %p46
    %p48 = scmp.ne.s32.totalorder %s37, %s38
    %p49 = scmp.eq.s32.totalorder %s15, 0
    %p50 = por %p48, %p49
    %p51 = scmp.ne.s32.totalorder %s37, %s38
    %p52 = scmp.eq.s32.totalorder %s16, 1
    %p53 = por %p51, %p52
    %p55 = scmp.ne.s32.totalorder %s38, %s54
    %p56 = scmp.eq.s32.totalorder %s16, 0
    %p57 = por %p55, %p56
    %s58 = sadd.s32 %s18, 1
    %s59 = smul.u32 %s58, 8
    %s60 = sadd.s32 %s25, 1
    %s61 = smul.u32 %s60, 8
    %s62 = ssub.s32 %s17, %s29
    %s63 = ssub.s32 %s59, %s61
    %s64 = sor.u32 %s62, %s63
    %p65 = scmp.eq.s32.totalorder %s64, 0
    %s67 = sadd.s32 %s66, 1
    %s68 = scalar_select %p65, %s66, %s67
    %p71 = pneg %p65
    %p72 = scmp.eq.s32.totalorder %s10, 1
    %p73 = por %p71, %p72
    %p74 = scmp.ne.s32.totalorder %s66, %s69
    %p75 = scmp.eq.s32.totalorder %s10, 0
    %p76 = por %p74, %p75
    %p77 = scmp.ne.s32.totalorder %s66, %s69
    %p78 = scmp.eq.s32.totalorder %s15, 1
    %p79 = por %p77, %p78
    %p80 = scmp.ne.s32.totalorder %s69, %s70
    %p81 = scmp.eq.s32.totalorder %s15, 0
    %p82 = por %p80, %p81
    %p83 = scmp.ne.s32.totalorder %s69, %s70
    %p84 = scmp.eq.s32.totalorder %s16, 1
    %p85 = por %p83, %p84
    %p87 = scmp.ne.s32.totalorder %s70, %s86
    %p88 = scmp.eq.s32.totalorder %s16, 0
    %p89 = por %p87, %p88
    %s91 = sadd.s32 %s90, 1
    %p94 = scmp.eq.s32.totalorder %s10, 1
    %p95 = scmp.ne.s32.totalorder %s90, %s92
    %p96 = scmp.eq.s32.totalorder %s10, 0
    %p97 = por %p95, %p96
    %p98 = scmp.ne.s32.totalorder %s90, %s92
    %p99 = scmp.eq.s32.totalorder %s15, 1
    %p100 = por %p98, %p99
    %p101 = scmp.ne.s32.totalorder %s92, %s93
    %p102 = scmp.eq.s32.totalorder %s15, 0
    %p103 = por %p101, %p102
    %p104 = scmp.ne.s32.totalorder %s92, %s93
    %p105 = scmp.eq.s32.totalorder %s16, 1
    %p106 = por %p104, %p105
    %p108 = scmp.ne.s32.totalorder %s93, %s107
    %p109 = scmp.eq.s32.totalorder %s16, 0
    %p110 = por %p108, %p109
    %s112 = sadd.s32 %s111, 1
    %p115 = scmp.eq.s32.totalorder %s10, 1
    %p116 = scmp.ne.s32.totalorder %s111, %s113
    %p117 = scmp.eq.s32.totalorder %s10, 0
    %p118 = por %p116, %p117
    %p119 = scmp.ne.s32.totalorder %s111, %s113
    %p120 = scmp.eq.s32.totalorder %s15, 1
    %p121 = por %p119, %p120
    %p122 = scmp.ne.s32.totalorder %s113, %s114
    %p123 = scmp.eq.s32.totalorder %s15, 0
    %p124 = por %p122, %p123
    %p125 = scmp.ne.s32.totalorder %s113, %s114
    %p126 = scmp.eq.s32.totalorder %s16, 1
    %p127 = por %p125, %p126
    %p129 = scmp.ne.s32.totalorder %s114, %s128
    %p130 = scmp.eq.s32.totalorder %s16, 0
    %p131 = por %p129, %p130
    %s132 = ssub.s32 %s17, %s29
    %s133 = ssub.s32 %s18, %s25
    %s134 = sor.u32 %s132, %s133
    %p135 = scmp.eq.s32.totalorder %s134, 0
    %s137 = sadd.s32 %s136, 1
    %s138 = scalar_select %p135, %s136, %s137
    %p141 = pneg %p135
    %p142 = scmp.eq.s32.totalorder %s10, 1
    %p143 = por %p141, %p142
    %p144 = scmp.ne.s32.totalorder %s136, %s139
    %p145 = scmp.eq.s32.totalorder %s10, 0
    %p146 = por %p144, %p145
    %p147 = scmp.ne.s32.totalorder %s136, %s139
    %p148 = scmp.eq.s32.totalorder %s15, 1
    %p149 = por %p147, %p148
    %p150 = scmp.ne.s32.totalorder %s139, %s140
    %p151 = scmp.eq.s32.totalorder %s15, 0
    %p152 = por %p150, %p151
    %p153 = scmp.ne.s32.totalorder %s139, %s140
    %p154 = scmp.eq.s32.totalorder %s16, 1
    %p155 = por %p153, %p154
    %p157 = scmp.ne.s32.totalorder %s140, %s156
    %p158 = scmp.eq.s32.totalorder %s16, 0
    %p159 = por %p157, %p158
    %p160 = scmp.le.s32.totalorder 1, %s10
    %p161 = scmp.lt.s32.totalorder %s10, 3
    %p162 = pnand %p160, %p161
    %p163 = pneg %p162
    // Predicated region
    $region9: #{_conv3x3_bn_relu.1} parent=5 // pred_check
      _
    $region10: #{_conv3x3_bn_relu.1} parent=5 // pred_check_branch
      %165 = sbr.rel (%p162) target = $region12
    $region11: #{_conv3x3_bn_relu.1} parent=5 // pred_region
      %s166 = ssub.s32 %s10, 1
      // Predicated region
      $region13: #{_conv3x3_bn_relu.1} parent=11 // pred_check
        %p167 = pneg %p103
      $region14: #{_conv3x3_bn_relu.1} parent=11 // pred_check_branch
        %169 = sbr.rel (%p167) target = $region16
      $region15: #{_conv3x3_bn_relu.1} parent=11 // pred_region
        _
      $region16: #{_conv3x3_bn_relu.1} parent=11 // pred_fallthru
        _
      // Predicated region
      $region17: #{_conv3x3_bn_relu.1} parent=11 // pred_check
        %p170 = pneg %p124
      $region18: #{_conv3x3_bn_relu.1} parent=11 // pred_check_branch
        %172 = sbr.rel (%p170) target = $region20
      $region19: #{_conv3x3_bn_relu.1} parent=11 // pred_region
        _
      $region20: #{_conv3x3_bn_relu.1} parent=11 // pred_fallthru
        _
    $region12: #{_conv3x3_bn_relu.1} parent=5 // pred_fallthru
      _
    %p173 = scmp.lt.s32.totalorder %s10, 2
    // Predicated region
    $region21: #{_conv3x3_bn_relu.1} parent=5 // pred_check
      %p174 = pneg %p173
    $region22: #{_conv3x3_bn_relu.1} parent=5 // pred_check_branch
      %176 = sbr.rel (%p174) target = $region24
    $region23: #{_conv3x3_bn_relu.1} parent=5 // pred_region
      // Predicated region
      $region25: #{_conv3x3_bn_relu.1} parent=23 // pred_check
        %p177 = pneg %p44
      $region26: #{_conv3x3_bn_relu.1} parent=23 // pred_check_branch
        %179 = sbr.rel (%p177) target = $region28
      $region27: #{_conv3x3_bn_relu.1} parent=23 // pred_region
        %s180 = smul.u32 16, %s18
        %s181 = ssub.s32 18, %s180
        %p182 = scmp.lt.s32.totalorder %s181, 16
        %s183 = scalar_select %p182, %s181, 16
        %s184 = smul.u32 4, %s183
        %s185 = smul.u32 %s184, 3
        %p186 = scmp.lt.s32.totalorder %s17, 1
        %s187 = scalar_select %p186, %s17, 1
        %p188 = scmp.lt.s32.totalorder %s180, 17
        %s189 = scalar_select %p188, %s180, 17
        %s190 = smul.addr %s189, 3
        %s191 = smul.addr %s187, 54
        %s192 = sadd.s32 %s190, %s191
        %s193 = smul.addr %s192, 4
        %s194 = scalar_lea.vmem %s0, %s193
        %s195 = smul.u32 16, %s18
        %s196 = ssub.s32 18, %s195
        %p197 = scmp.lt.s32.totalorder %s196, 16
        %s198 = scalar_select %p197, %s196, 16
        %s199 = smul.u32 4, %s198
        %s200 = smul.u32 %s199, 3
      $region28: #{_conv3x3_bn_relu.1} parent=23 // pred_fallthru
        _
      // Predicated region
      $region29: #{_conv3x3_bn_relu.1} parent=23 // pred_check
        %p201 = pneg %p76
      $region30: #{_conv3x3_bn_relu.1} parent=23 // pred_check_branch
        %203 = sbr.rel (%p201) target = $region32
      $region31: #{_conv3x3_bn_relu.1} parent=23 // pred_region
        %s204 = sadd.s32 %s18, 1
        %s205 = smul.u32 %s204, 8
        %s206 = smul.u32 2, %s205
        %p207 = scmp.lt.s32.totalorder %s17, 1
        %s208 = scalar_select %p207, %s17, 1
        %p209 = scmp.lt.s32.totalorder %s206, 17
        %s210 = scalar_select %p209, %s206, 17
        %s211 = smul.addr %s210, 3
        %s212 = smul.addr %s208, 54
        %s213 = sadd.s32 %s211, %s212
        %s214 = smul.addr %s213, 4
        %s215 = scalar_lea.vmem %s1, %s214
        %s216 = sadd.s32 %s18, 1
        %s217 = smul.u32 %s216, 8
        %s218 = smul.u32 2, %s217
      $region32: #{_conv3x3_bn_relu.1} parent=23 // pred_fallthru
        _
    $region24: #{_conv3x3_bn_relu.1} parent=5 // pred_fallthru
      _
    %p219 = scmp.le.s32.totalorder 1, %s10
    %p220 = scmp.lt.s32.totalorder %s10, 3
    %p221 = pnand %p219, %p220
    %p222 = pneg %p221
    // Predicated region
    $region33: #{_conv3x3_bn_relu.1} parent=5 // pred_check
      _
    $region34: #{_conv3x3_bn_relu.1} parent=5 // pred_check_branch
      %224 = sbr.rel (%p221) target = $region36
    $region35: #{_conv3x3_bn_relu.1} parent=5 // pred_region
      %s225 = ssub.s32 %s10, 1
      %s226 = smul.u32 16, %s20
      %s227 = ssub.s32 18, %s226
      %p228 = scmp.lt.s32.totalorder %s227, 16
      %s229 = scalar_select %p228, %s227, 16
      %s230 = smul.u32 4, %s229
      %s231 = smul.u32 %s230, 3
      %p232 = scmp.lt.s32.totalorder %s19, 1
      %s233 = scalar_select %p232, %s19, 1
      %p234 = scmp.lt.s32.totalorder %s226, 17
      %s235 = scalar_select %p234, %s226, 17
      %s236 = smul.addr %s235, 3
      %s237 = smul.addr %s233, 54
      %s238 = sadd.s32 %s236, %s237
      %s239 = smul.addr %s238, 4
      %s240 = scalar_lea.vmem %s0, %s239
      %p241 = pneg %p50
      %p242 = pneg %p47
      %s243 = sadd.s32 %s20, 1
      %s244 = smul.u32 %s243, 8
      %s245 = smul.u32 2, %s244
      %p246 = scmp.lt.s32.totalorder %s19, 1
      %s247 = scalar_select %p246, %s19, 1
      %p248 = scmp.lt.s32.totalorder %s245, 17
      %s249 = scalar_select %p248, %s245, 17
      %s250 = smul.addr %s249, 3
      %s251 = smul.addr %s247, 54
      %s252 = sadd.s32 %s250, %s251
      %s253 = smul.addr %s252, 4
      %s254 = scalar_lea.vmem %s1, %s253
      %p255 = pneg %p82
      %p256 = pneg %p79
      %p257 = pneg %p103
      %p258 = pneg %p100
      %p259 = pneg %p124
      %p260 = pneg %p121
      %p261 = pneg %p152
      %p262 = pneg %p149
      %s263 = smul.u32 32, %s20
      %p264 = scmp.lt.s32.totalorder %s19, 1
      %s265 = scalar_select %p264, %s19, 1
      %p266 = scmp.lt.s32.totalorder %s263, 31
      %s267 = scalar_select %p266, %s263, 31
      %s268 = smul.addr %s265, 32
      %s269 = sadd.s32 %s267, %s268
      %s270 = smul.addr %s269, 4
      %s271 = scalar_lea.vmem %s4, %s270
      %s272 = smul.u32 16, %s20
      %s273 = ssub.s32 18, %s272
      %p274 = scmp.lt.s32.totalorder %s273, 16
      %s275 = scalar_select %p274, %s273, 16
      %s276 = smul.u32 4, %s275
      %s277 = smul.u32 %s276, 3
      %p278 = scmp.lt.s32.totalorder %s19, 1
      %s279 = scalar_select %p278, %s19, 1
      %p280 = scmp.lt.s32.totalorder %s272, 17
      %s281 = scalar_select %p280, %s272, 17
      %s282 = smul.addr %s281, 3
      %s283 = smul.addr %s279, 54
      %s284 = sadd.s32 %s282, %s283
      %s285 = smul.addr %s284, 4
      %s286 = scalar_lea.vmem %s0, %s285
      %s287 = smul.u32 16, %s20
      %s288 = ssub.s32 18, %s287
      %p289 = scmp.lt.s32.totalorder %s288, 16
      %s290 = scalar_select %p289, %s288, 16
      %s291 = smul.u32 4, %s290
      %s292 = smul.u32 %s291, 3
      %s293 = sadd.s32 %s20, 1
      %s294 = smul.u32 %s293, 8
      %s295 = smul.u32 2, %s294
      %p296 = scmp.lt.s32.totalorder %s19, 1
      %s297 = scalar_select %p296, %s19, 1
      %p298 = scmp.lt.s32.totalorder %s295, 17
      %s299 = scalar_select %p298, %s295, 17
      %s300 = smul.addr %s299, 3
      %s301 = smul.addr %s297, 54
      %s302 = sadd.s32 %s300, %s301
      %s303 = smul.addr %s302, 4
      %s304 = scalar_lea.vmem %s1, %s303
      %s305 = sadd.s32 %s20, 1
      %s306 = smul.u32 %s305, 8
      %s307 = smul.u32 2, %s306
      %s308 = smul.u32 32, %s20
      %p309 = scmp.lt.s32.totalorder %s19, 1
      %s310 = scalar_select %p309, %s19, 1
      %p311 = scmp.lt.s32.totalorder %s308, 31
      %s312 = scalar_select %p311, %s308, 31
      %s313 = smul.addr %s310, 32
      %s314 = sadd.s32 %s312, %s313
      %s315 = smul.addr %s314, 4
      %s316 = scalar_lea.vmem %s4, %s315
      %s317 = smul.u32 32, %s20
      %v319 = vld [vmem:[%s286] sm:$0xf]
      %v320 = vld [vmem:[%s286 + $0x4] sm:$0xf]
      %v321 = vld [vmem:[%s286 + $0x8] sm:$0x1]
      %v322 = vld [vmem:[%s286 + $0xc] sm:$0xf]
      %v323 = vld [vmem:[%s286 + $0x10] sm:$0xf]
      %v324 = vld [vmem:[%s286 + $0x14] sm:$0x1]
      %v325 = vld [vmem:[%s286 + $0x18] sm:$0xf]
      %v326 = vld [vmem:[%s286 + $0x1c] sm:$0xf]
      %v327 = vld [vmem:[%s286 + $0x20] sm:$0x1]
      %v328 = vld [vmem:[%s286 + $0x24] sm:$0xf]
      %v329 = vld [vmem:[%s286 + $0x28] sm:$0xf]
      %v330 = vld [vmem:[%s286 + $0x2c] sm:$0x1]
      %v331 = vld [vmem:[%s286 + $0x30] sm:$0xf]
      %v332 = vld [vmem:[%s286 + $0x34] sm:$0xf]
      %v333 = vld [vmem:[%s286 + $0x38] sm:$0x1]
      %v334 = vld [vmem:[%s286 + $0x3c] sm:$0xf]
      %v335 = vld [vmem:[%s286 + $0x40] sm:$0xf]
      %v336 = vld [vmem:[%s286 + $0x44] sm:$0x1]
      %v337 = vld [vmem:[%s286 + $0x48] sm:$0xf]
      %v338 = vld [vmem:[%s286 + $0x4c] sm:$0xf]
      %v339 = vld [vmem:[%s286 + $0x50] sm:$0x1]
      %v340 = vld [vmem:[%s286 + $0x54] sm:$0xf]
      %v341 = vld [vmem:[%s286 + $0x58] sm:$0xf]
      %v342 = vld [vmem:[%s286 + $0x5c] sm:$0x1]
      %v343 = vld [vmem:[%s286 + $0x60] sm:$0xf]
      %v344 = vld [vmem:[%s286 + $0x64] sm:$0xf]
      %v345 = vld [vmem:[%s286 + $0x68] sm:$0x1]
      %v346 = vld [vmem:[%s286 + $0x6c] sm:$0xf]
      %v347 = vld [vmem:[%s286 + $0x70] sm:$0xf]
      %v348 = vld [vmem:[%s286 + $0x74] sm:$0x1]
      %v349 = vld [vmem:[%s286 + $0x78] sm:$0xf]
      %v350 = vld [vmem:[%s286 + $0x7c] sm:$0xf]
      %v351 = vld [vmem:[%s286 + $0x80] sm:$0x1]
      %v352 = vld [vmem:[%s286 + $0x84] sm:$0xf]
      %v353 = vld [vmem:[%s286 + $0x88] sm:$0xf]
      %v354 = vld [vmem:[%s286 + $0x8c] sm:$0x1]
      %v355 = vld [vmem:[%s286 + $0x90] sm:$0xf]
      %v356 = vld [vmem:[%s286 + $0x94] sm:$0xf]
      %v357 = vld [vmem:[%s286 + $0x98] sm:$0x1]
      %v358 = vld [vmem:[%s286 + $0x9c] sm:$0xf]
      %v359 = vld [vmem:[%s286 + $0xa0] sm:$0xf]
      %v360 = vld [vmem:[%s286 + $0xa4] sm:$0x1]
      %v361 = vld [vmem:[%s286 + $0xa8] sm:$0xf]
      %v362 = vld [vmem:[%s286 + $0xac] sm:$0xf]
      %v363 = vld [vmem:[%s286 + $0xb0] sm:$0x1]
      %v364 = vld [vmem:[%s286 + $0xb4] sm:$0xf]
      %v365 = vld [vmem:[%s286 + $0xb8] sm:$0xf]
      %v366 = vld [vmem:[%s286 + $0xbc] sm:$0x1]
      %v367 = vld [vmem:[%s304] sm:$0xf]
      %v368 = vld [vmem:[%s304 + $0x4] sm:$0xf]
      %v369 = vld [vmem:[%s304 + $0x8] sm:$0x1]
      %v370 = vld [vmem:[%s304 + $0xc] sm:$0xf]
      %v371 = vld [vmem:[%s304 + $0x10] sm:$0xf]
      %v372 = vld [vmem:[%s304 + $0x14] sm:$0x1]
      %v405 = vunpack.c.l.b16 %v319
      %v406 = vunpack.c.l.b16 %v320
      %v407 = vunpack.c.l.b16 %v322
      %v408 = vunpack.c.l.b16 %v323
      %v409 = vunpack.c.l.b16 %v325
      %v410 = vunpack.c.l.b16 %v326
      %v411 = vunpack.c.l.b16 %v328
      %v412 = vunpack.c.l.b16 %v329
      %v413 = vunpack.c.l.b16 %v331
      %v414 = vunpack.c.l.b16 %v332
      %v415 = vunpack.c.l.b16 %v334
      %v416 = vunpack.c.l.b16 %v335
      %v417 = vunpack.c.l.b16 %v337
      %v418 = vunpack.c.l.b16 %v338
      %v419 = vunpack.c.l.b16 %v340
      %v420 = vunpack.c.l.b16 %v341
      %v421 = vunpack.c.l.b16 %v343
      %v422 = vunpack.c.l.b16 %v344
      %v423 = vunpack.c.l.b16 %v346
      %v424 = vunpack.c.l.b16 %v347
      %v425 = vunpack.c.l.b16 %v349
      %v426 = vunpack.c.l.b16 %v350
      %v427 = vunpack.c.l.b16 %v352
      %v428 = vunpack.c.l.b16 %v353
      %v429 = vunpack.c.l.b16 %v355
      %v430 = vunpack.c.l.b16 %v356
      %v431 = vunpack.c.l.b16 %v358
      %v432 = vunpack.c.l.b16 %v359
      %v433 = vunpack.c.l.b16 %v361
      %v434 = vunpack.c.l.b16 %v362
      %v435 = vunpack.c.l.b16 %v364
      %v436 = vunpack.c.l.b16 %v365
      %v437 = vpack.c.b16 %v406, %v405
      %v438 = vpack.c.b16 %v408, %v407
      %v439 = vpack.c.b16 %v410, %v409
      %v440 = vpack.c.b16 %v412, %v411
      %v441 = vpack.c.b16 %v414, %v413
      %v442 = vpack.c.b16 %v416, %v415
      %v443 = vpack.c.b16 %v418, %v417
      %v444 = vpack.c.b16 %v420, %v419
      %v445 = vpack.c.b16 %v422, %v421
      %v446 = vpack.c.b16 %v424, %v423
      %v447 = vpack.c.b16 %v426, %v425
      %v448 = vpack.c.b16 %v428, %v427
      %v449 = vpack.c.b16 %v430, %v429
      %v450 = vpack.c.b16 %v432, %v431
      %v451 = vpack.c.b16 %v434, %v433
      %v452 = vpack.c.b16 %v436, %v435
      %v469 = vunpack.c.l.b16 %v321
      %v470 = vunpack.c.l.b16 %v324
      %v471 = vunpack.c.l.b16 %v327
      %v472 = vunpack.c.l.b16 %v330
      %v473 = vunpack.c.l.b16 %v333
      %v474 = vunpack.c.l.b16 %v336
      %v475 = vunpack.c.l.b16 %v339
      %v476 = vunpack.c.l.b16 %v342
      %v477 = vunpack.c.l.b16 %v345
      %v478 = vunpack.c.l.b16 %v348
      %v479 = vunpack.c.l.b16 %v351
      %v480 = vunpack.c.l.b16 %v354
      %v481 = vunpack.c.l.b16 %v357
      %v482 = vunpack.c.l.b16 %v360
      %v483 = vunpack.c.l.b16 %v363
      %v484 = vunpack.c.l.b16 %v366
      %v485 = vpack.c.b16 %v469, %v469
      %v486 = vpack.c.b16 %v470, %v470
      %v487 = vpack.c.b16 %v471, %v471
      %v488 = vpack.c.b16 %v472, %v472
      %v489 = vpack.c.b16 %v473, %v473
      %v490 = vpack.c.b16 %v474, %v474
      %v491 = vpack.c.b16 %v475, %v475
      %v492 = vpack.c.b16 %v476, %v476
      %v493 = vpack.c.b16 %v477, %v477
      %v494 = vpack.c.b16 %v478, %v478
      %v495 = vpack.c.b16 %v479, %v479
      %v496 = vpack.c.b16 %v480, %v480
      %v497 = vpack.c.b16 %v481, %v481
      %v498 = vpack.c.b16 %v482, %v482
      %v499 = vpack.c.b16 %v483, %v483
      %v500 = vpack.c.b16 %v484, %v484
      %vm501 = vsmask.f32 7424
      %v503 = vshrl.u32 %v437, 16
      %v505 = vshll.u32 %v437, 16
      %v507 = vrot.slane %v505, 1
      %v508 = vor.u32 %v503, %v507
      %v510 = vshll.u32 %v485, 16
      %v512 = vrot.slane %v510, 1
      %v513 = vsel %vm501, %v508, %v512
      %v515 = vshrl.u32 %v438, 16
      %v517 = vshll.u32 %v438, 16
      %v519 = vrot.slane %v517, 1
      %v520 = vor.u32 %v515, %v519
      %v522 = vshll.u32 %v486, 16
      %v524 = vrot.slane %v522, 1
      %v525 = vsel %vm501, %v520, %v524
      %v527 = vshrl.u32 %v439, 16
      %v529 = vshll.u32 %v439, 16
      %v531 = vrot.slane %v529, 1
      %v532 = vor.u32 %v527, %v531
      %v534 = vshll.u32 %v487, 16
      %v536 = vrot.slane %v534, 1
      %v537 = vsel %vm501, %v532, %v536
      %v539 = vshrl.u32 %v440, 16
      %v541 = vshll.u32 %v440, 16
      %v543 = vrot.slane %v541, 1
      %v544 = vor.u32 %v539, %v543
      %v546 = vshll.u32 %v488, 16
      %v548 = vrot.slane %v546, 1
      %v549 = vsel %vm501, %v544, %v548
      %v551 = vshrl.u32 %v441, 16
      %v553 = vshll.u32 %v441, 16
      %v555 = vrot.slane %v553, 1
      %v556 = vor.u32 %v551, %v555
      %v558 = vshll.u32 %v489, 16
      %v560 = vrot.slane %v558, 1
      %v561 = vsel %vm501, %v556, %v560
      %v563 = vshrl.u32 %v442, 16
      %v565 = vshll.u32 %v442, 16
      %v567 = vrot.slane %v565, 1
      %v568 = vor.u32 %v563, %v567
      %v570 = vshll.u32 %v490, 16
      %v572 = vrot.slane %v570, 1
      %v573 = vsel %vm501, %v568, %v572
      %v575 = vshrl.u32 %v443, 16
      %v577 = vshll.u32 %v443, 16
      %v579 = vrot.slane %v577, 1
      %v580 = vor.u32 %v575, %v579
      %v582 = vshll.u32 %v491, 16
      %v584 = vrot.slane %v582, 1
      %v585 = vsel %vm501, %v580, %v584
      %v587 = vshrl.u32 %v444, 16
      %v589 = vshll.u32 %v444, 16
      %v591 = vrot.slane %v589, 1
      %v592 = vor.u32 %v587, %v591
      %v594 = vshll.u32 %v492, 16
      %v596 = vrot.slane %v594, 1
      %v597 = vsel %vm501, %v592, %v596
      %v599 = vshrl.u32 %v445, 16
      %v601 = vshll.u32 %v445, 16
      %v603 = vrot.slane %v601, 1
      %v604 = vor.u32 %v599, %v603
      %v606 = vshll.u32 %v493, 16
      %v608 = vrot.slane %v606, 1
      %v609 = vsel %vm501, %v604, %v608
      %v611 = vshrl.u32 %v446, 16
      %v613 = vshll.u32 %v446, 16
      %v615 = vrot.slane %v613, 1
      %v616 = vor.u32 %v611, %v615
      %v618 = vshll.u32 %v494, 16
      %v620 = vrot.slane %v618, 1
      %v621 = vsel %vm501, %v616, %v620
      %v623 = vshrl.u32 %v447, 16
      %v625 = vshll.u32 %v447, 16
      %v627 = vrot.slane %v625, 1
      %v628 = vor.u32 %v623, %v627
      %v630 = vshll.u32 %v495, 16
      %v632 = vrot.slane %v630, 1
      %v633 = vsel %vm501, %v628, %v632
      %v635 = vshrl.u32 %v448, 16
      %v637 = vshll.u32 %v448, 16
      %v639 = vrot.slane %v637, 1
      %v640 = vor.u32 %v635, %v639
      %v642 = vshll.u32 %v496, 16
      %v644 = vrot.slane %v642, 1
      %v645 = vsel %vm501, %v640, %v644
      %v647 = vshrl.u32 %v449, 16
      %v649 = vshll.u32 %v449, 16
      %v651 = vrot.slane %v649, 1
      %v652 = vor.u32 %v647, %v651
      %v654 = vshll.u32 %v497, 16
      %v656 = vrot.slane %v654, 1
      %v657 = vsel %vm501, %v652, %v656
      %v659 = vshrl.u32 %v450, 16
      %v661 = vshll.u32 %v450, 16
      %v663 = vrot.slane %v661, 1
      %v664 = vor.u32 %v659, %v663
      %v666 = vshll.u32 %v498, 16
      %v668 = vrot.slane %v666, 1
      %v669 = vsel %vm501, %v664, %v668
      %v671 = vshrl.u32 %v451, 16
      %v673 = vshll.u32 %v451, 16
      %v675 = vrot.slane %v673, 1
      %v676 = vor.u32 %v671, %v675
      %v678 = vshll.u32 %v499, 16
      %v680 = vrot.slane %v678, 1
      %v681 = vsel %vm501, %v676, %v680
      %v683 = vshrl.u32 %v452, 16
      %v685 = vshll.u32 %v452, 16
      %v687 = vrot.slane %v685, 1
      %v688 = vor.u32 %v683, %v687
      %v690 = vshll.u32 %v500, 16
      %v692 = vrot.slane %v690, 1
      %v693 = vsel %vm501, %v688, %v692
      %694 = vrot.lane.b32.xlu0 %v513, 4
      %v695 = vpop.permute.xlu0 %694
      %696 = vrot.lane.b32.xlu0 %v525, 4
      %v697 = vpop.permute.xlu0 %696
      %698 = vrot.lane.b32.xlu0 %v537, 4
      %v699 = vpop.permute.xlu0 %698
      %700 = vrot.lane.b32.xlu0 %v549, 4
      %v701 = vpop.permute.xlu0 %700
      %702 = vrot.lane.b32.xlu0 %v561, 4
      %v703 = vpop.permute.xlu0 %702
      %704 = vrot.lane.b32.xlu0 %v573, 4
      %v705 = vpop.permute.xlu0 %704
      %706 = vrot.lane.b32.xlu0 %v585, 4
      %v707 = vpop.permute.xlu0 %706
      %708 = vrot.lane.b32.xlu0 %v597, 4
      %v709 = vpop.permute.xlu0 %708
      %710 = vrot.lane.b32.xlu0 %v609, 4
      %v711 = vpop.permute.xlu0 %710
      %712 = vrot.lane.b32.xlu0 %v621, 4
      %v713 = vpop.permute.xlu0 %712
      %714 = vrot.lane.b32.xlu0 %v633, 4
      %v715 = vpop.permute.xlu0 %714
      %716 = vrot.lane.b32.xlu0 %v645, 4
      %v717 = vpop.permute.xlu0 %716
      %718 = vrot.lane.b32.xlu0 %v657, 4
      %v719 = vpop.permute.xlu0 %718
      %720 = vrot.lane.b32.xlu0 %v669, 4
      %v721 = vpop.permute.xlu0 %720
      %722 = vrot.lane.b32.xlu0 %v681, 4
      %v723 = vpop.permute.xlu0 %722
      %724 = vrot.lane.b32.xlu0 %v693, 4
      %v725 = vpop.permute.xlu0 %724
      %vm726 = vcmask 1046528
      %v727 = vrot.slane %v437, 1
      %v728 = vrot.slane %v485, 1
      %v729 = vsel %vm726, %v727, %v728
      %v730 = vrot.slane %v438, 1
      %v731 = vrot.slane %v486, 1
      %v732 = vsel %vm726, %v730, %v731
      %v733 = vrot.slane %v439, 1
      %v734 = vrot.slane %v487, 1
      %v735 = vsel %vm726, %v733, %v734
      %v736 = vrot.slane %v440, 1
      %v737 = vrot.slane %v488, 1
      %v738 = vsel %vm726, %v736, %v737
      %v739 = vrot.slane %v441, 1
      %v740 = vrot.slane %v489, 1
      %v741 = vsel %vm726, %v739, %v740
      %v742 = vrot.slane %v442, 1
      %v743 = vrot.slane %v490, 1
      %v744 = vsel %vm726, %v742, %v743
      %v745 = vrot.slane %v443, 1
      %v746 = vrot.slane %v491, 1
      %v747 = vsel %vm726, %v745, %v746
      %v748 = vrot.slane %v444, 1
      %v749 = vrot.slane %v492, 1
      %v750 = vsel %vm726, %v748, %v749
      %v751 = vrot.slane %v445, 1
      %v752 = vrot.slane %v493, 1
      %v753 = vsel %vm726, %v751, %v752
      %v754 = vrot.slane %v446, 1
      %v755 = vrot.slane %v494, 1
      %v756 = vsel %vm726, %v754, %v755
      %v757 = vrot.slane %v447, 1
      %v758 = vrot.slane %v495, 1
      %v759 = vsel %vm726, %v757, %v758
      %v760 = vrot.slane %v448, 1
      %v761 = vrot.slane %v496, 1
      %v762 = vsel %vm726, %v760, %v761
      %v763 = vrot.slane %v449, 1
      %v764 = vrot.slane %v497, 1
      %v765 = vsel %vm726, %v763, %v764
      %v766 = vrot.slane %v450, 1
      %v767 = vrot.slane %v498, 1
      %v768 = vsel %vm726, %v766, %v767
      %v769 = vrot.slane %v451, 1
      %v770 = vrot.slane %v499, 1
      %v771 = vsel %vm726, %v769, %v770
      %v772 = vrot.slane %v452, 1
      %v773 = vrot.slane %v500, 1
      %v774 = vsel %vm726, %v772, %v773
      %775 = vrot.lane.b32.xlu0 %v729, 8
      %v776 = vpop.permute.xlu0 %775
      %777 = vrot.lane.b32.xlu0 %v732, 8
      %v778 = vpop.permute.xlu0 %777
      %779 = vrot.lane.b32.xlu0 %v735, 8
      %v780 = vpop.permute.xlu0 %779
      %781 = vrot.lane.b32.xlu0 %v738, 8
      %v782 = vpop.permute.xlu0 %781
      %783 = vrot.lane.b32.xlu0 %v741, 8
      %v784 = vpop.permute.xlu0 %783
      %785 = vrot.lane.b32.xlu0 %v744, 8
      %v786 = vpop.permute.xlu0 %785
      %787 = vrot.lane.b32.xlu0 %v747, 8
      %v788 = vpop.permute.xlu0 %787
      %789 = vrot.lane.b32.xlu0 %v750, 8
      %v790 = vpop.permute.xlu0 %789
      %791 = vrot.lane.b32.xlu0 %v753, 8
      %v792 = vpop.permute.xlu0 %791
      %793 = vrot.lane.b32.xlu0 %v756, 8
      %v794 = vpop.permute.xlu0 %793
      %795 = vrot.lane.b32.xlu0 %v759, 8
      %v796 = vpop.permute.xlu0 %795
      %797 = vrot.lane.b32.xlu0 %v762, 8
      %v798 = vpop.permute.xlu0 %797
      %799 = vrot.lane.b32.xlu0 %v765, 8
      %v800 = vpop.permute.xlu0 %799
      %801 = vrot.lane.b32.xlu0 %v768, 8
      %v802 = vpop.permute.xlu0 %801
      %803 = vrot.lane.b32.xlu0 %v771, 8
      %v804 = vpop.permute.xlu0 %803
      %805 = vrot.lane.b32.xlu0 %v774, 8
      %v806 = vpop.permute.xlu0 %805
      %vm807 = vcmask 31744
      %v809 = vsel %vm807, %v437, %v695
      %v811 = vsel %vm807, %v438, %v697
      %v813 = vsel %vm807, %v439, %v699
      %v815 = vsel %vm807, %v440, %v701
      %v817 = vsel %vm807, %v441, %v703
      %v819 = vsel %vm807, %v442, %v705
      %v821 = vsel %vm807, %v443, %v707
      %v823 = vsel %vm807, %v444, %v709
      %v825 = vsel %vm807, %v445, %v711
      %v827 = vsel %vm807, %v446, %v713
      %v829 = vsel %vm807, %v447, %v715
      %v831 = vsel %vm807, %v448, %v717
      %v833 = vsel %vm807, %v449, %v719
      %v835 = vsel %vm807, %v450, %v721
      %v837 = vsel %vm807, %v451, %v723
      %v839 = vsel %vm807, %v452, %v725
      %vm840 = vcmask 64512
      %v842 = vsel %vm840, %v809, %v776
      %v844 = vsel %vm840, %v811, %v778
      %v846 = vsel %vm840, %v813, %v780
      %v848 = vsel %vm840, %v815, %v782
      %v850 = vsel %vm840, %v817, %v784
      %v852 = vsel %vm840, %v819, %v786
      %v854 = vsel %vm840, %v821, %v788
      %v856 = vsel %vm840, %v823, %v790
      %v858 = vsel %vm840, %v825, %v792
      %v860 = vsel %vm840, %v827, %v794
      %v862 = vsel %vm840, %v829, %v796
      %v864 = vsel %vm840, %v831, %v798
      %v866 = vsel %vm840, %v833, %v800
      %v868 = vsel %vm840, %v835, %v802
      %v870 = vsel %vm840, %v837, %v804
      %v872 = vsel %vm840, %v839, %v806
      %v889 = vunpack.c.l.b16 %v842
      %v890 = vunpack.c.h.b16 %v842
      %v891 = vunpack.c.l.b16 %v844
      %v892 = vunpack.c.h.b16 %v844
      %v893 = vunpack.c.l.b16 %v846
      %v894 = vunpack.c.h.b16 %v846
      %v895 = vunpack.c.l.b16 %v848
      %v896 = vunpack.c.h.b16 %v848
      %v897 = vunpack.c.l.b16 %v850
      %v898 = vunpack.c.h.b16 %v850
      %v899 = vunpack.c.l.b16 %v852
      %v900 = vunpack.c.h.b16 %v852
      %v901 = vunpack.c.l.b16 %v854
      %v902 = vunpack.c.h.b16 %v854
      %v903 = vunpack.c.l.b16 %v856
      %v904 = vunpack.c.h.b16 %v856
      %v905 = vunpack.c.l.b16 %v858
      %v906 = vunpack.c.h.b16 %v858
      %v907 = vunpack.c.l.b16 %v860
      %v908 = vunpack.c.h.b16 %v860
      %v909 = vunpack.c.l.b16 %v862
      %v910 = vunpack.c.h.b16 %v862
      %v911 = vunpack.c.l.b16 %v864
      %v912 = vunpack.c.h.b16 %v864
      %v913 = vunpack.c.l.b16 %v866
      %v914 = vunpack.c.h.b16 %v866
      %v915 = vunpack.c.l.b16 %v868
      %v916 = vunpack.c.h.b16 %v868
      %v917 = vunpack.c.l.b16 %v870
      %v918 = vunpack.c.h.b16 %v870
      %v919 = vunpack.c.l.b16 %v872
      %v920 = vunpack.c.h.b16 %v872
      %v921 = vpack.c.b16 %v889, %v889
      %v922 = vpack.c.b16 %v890, %v890
      %v923 = vpack.c.b16 %v891, %v891
      %v924 = vpack.c.b16 %v892, %v892
      %v925 = vpack.c.b16 %v893, %v893
      %v926 = vpack.c.b16 %v894, %v894
      %v927 = vpack.c.b16 %v895, %v895
      %v928 = vpack.c.b16 %v896, %v896
      %v929 = vpack.c.b16 %v897, %v897
      %v930 = vpack.c.b16 %v898, %v898
      %v931 = vpack.c.b16 %v899, %v899
      %v932 = vpack.c.b16 %v900, %v900
      %v933 = vpack.c.b16 %v901, %v901
      %v934 = vpack.c.b16 %v902, %v902
      %v935 = vpack.c.b16 %v903, %v903
      %v936 = vpack.c.b16 %v904, %v904
      %v937 = vpack.c.b16 %v905, %v905
      %v938 = vpack.c.b16 %v906, %v906
      %v939 = vpack.c.b16 %v907, %v907
      %v940 = vpack.c.b16 %v908, %v908
      %v941 = vpack.c.b16 %v909, %v909
      %v942 = vpack.c.b16 %v910, %v910
      %v943 = vpack.c.b16 %v911, %v911
      %v944 = vpack.c.b16 %v912, %v912
      %v945 = vpack.c.b16 %v913, %v913
      %v946 = vpack.c.b16 %v914, %v914
      %v947 = vpack.c.b16 %v915, %v915
      %v948 = vpack.c.b16 %v916, %v916
      %v949 = vpack.c.b16 %v917, %v917
      %v950 = vpack.c.b16 %v918, %v918
      %v951 = vpack.c.b16 %v919, %v919
      %v952 = vpack.c.b16 %v920, %v920
      %vm985 = vcmask 93184
      %986 = vst.msk [vmem:[#allocation2] sm:$0xf] %vm985, %v921
      %987 = vst.msk [vmem:[#allocation2 + $0x4] sm:$0xf] %vm985, %v922
      %988 = vst.msk [vmem:[#allocation2 + $0x8] sm:$0xf] %vm985, %v923
      %989 = vst.msk [vmem:[#allocation2 + $0xc] sm:$0xf] %vm985, %v924
      %990 = vst.msk [vmem:[#allocation2 + $0x10] sm:$0xf] %vm985, %v925
      %991 = vst.msk [vmem:[#allocation2 + $0x14] sm:$0xf] %vm985, %v926
      %992 = vst.msk [vmem:[#allocation2 + $0x18] sm:$0xf] %vm985, %v927
      %993 = vst.msk [vmem:[#allocation2 + $0x1c] sm:$0xf] %vm985, %v928
      %994 = vst.msk [vmem:[#allocation2 + $0x20] sm:$0xf] %vm985, %v929
      %995 = vst.msk [vmem:[#allocation2 + $0x24] sm:$0xf] %vm985, %v930
      %996 = vst.msk [vmem:[#allocation2 + $0x28] sm:$0xf] %vm985, %v931
      %997 = vst.msk [vmem:[#allocation2 + $0x2c] sm:$0xf] %vm985, %v932
      %998 = vst.msk [vmem:[#allocation2 + $0x30] sm:$0xf] %vm985, %v933
      %999 = vst.msk [vmem:[#allocation2 + $0x34] sm:$0xf] %vm985, %v934
      %1000 = vst.msk [vmem:[#allocation2 + $0x38] sm:$0xf] %vm985, %v935
      %1001 = vst.msk [vmem:[#allocation2 + $0x3c] sm:$0xf] %vm985, %v936
      %1002 = vst.msk [vmem:[#allocation2 + $0x40] sm:$0xf] %vm985, %v937
      %1003 = vst.msk [vmem:[#allocation2 + $0x44] sm:$0xf] %vm985, %v938
      %1004 = vst.msk [vmem:[#allocation2 + $0x48] sm:$0xf] %vm985, %v939
      %1005 = vst.msk [vmem:[#allocation2 + $0x4c] sm:$0xf] %vm985, %v940
      %1006 = vst.msk [vmem:[#allocation2 + $0x50] sm:$0xf] %vm985, %v941
      %1007 = vst.msk [vmem:[#allocation2 + $0x54] sm:$0xf] %vm985, %v942
      %1008 = vst.msk [vmem:[#allocation2 + $0x58] sm:$0xf] %vm985, %v943
      %1009 = vst.msk [vmem:[#allocation2 + $0x5c] sm:$0xf] %vm985, %v944
      %1010 = vst.msk [vmem:[#allocation2 + $0x60] sm:$0xf] %vm985, %v945
      %1011 = vst.msk [vmem:[#allocation2 + $0x64] sm:$0xf] %vm985, %v946
      %1012 = vst.msk [vmem:[#allocation2 + $0x68] sm:$0xf] %vm985, %v947
      %1013 = vst.msk [vmem:[#allocation2 + $0x6c] sm:$0xf] %vm985, %v948
      %1014 = vst.msk [vmem:[#allocation2 + $0x70] sm:$0xf] %vm985, %v949
      %1015 = vst.msk [vmem:[#allocation2 + $0x74] sm:$0xf] %vm985, %v950
      %1016 = vst.msk [vmem:[#allocation2 + $0x78] sm:$0xf] %vm985, %v951
      %1017 = vst.msk [vmem:[#allocation2 + $0x7c] sm:$0xf] %vm985, %v952
      %v1022 = vunpack.c.l.b16 %v367
      %v1023 = vunpack.c.l.b16 %v368
      %v1024 = vunpack.c.l.b16 %v370
      %v1025 = vunpack.c.l.b16 %v371
      %v1026 = vpack.c.b16 %v1023, %v1022
      %v1027 = vpack.c.b16 %v1025, %v1024
      %v1030 = vunpack.c.l.b16 %v369
      %v1031 = vunpack.c.l.b16 %v372
      %v1032 = vpack.c.b16 %v1030, %v1030
      %v1033 = vpack.c.b16 %v1031, %v1031
      %v1035 = vshrl.u32 %v1026, 16
      %v1037 = vshll.u32 %v1026, 16
      %v1039 = vrot.slane %v1037, 1
      %v1040 = vor.u32 %v1035, %v1039
      %v1042 = vshll.u32 %v1032, 16
      %v1044 = vrot.slane %v1042, 1
      %v1045 = vsel %vm501, %v1040, %v1044
      %v1047 = vshrl.u32 %v1027, 16
      %v1049 = vshll.u32 %v1027, 16
      %v1051 = vrot.slane %v1049, 1
      %v1052 = vor.u32 %v1047, %v1051
      %v1054 = vshll.u32 %v1033, 16
      %v1056 = vrot.slane %v1054, 1
      %v1057 = vsel %vm501, %v1052, %v1056
      %1058 = vrot.lane.b32.xlu0 %v1045, 4
      %v1059 = vpop.permute.xlu0 %1058
      %1060 = vrot.lane.b32.xlu0 %v1057, 4
      %v1061 = vpop.permute.xlu0 %1060
      %v1062 = vrot.slane %v1026, 1
      %v1063 = vrot.slane %v1032, 1
      %v1064 = vsel %vm726, %v1062, %v1063
      %v1065 = vrot.slane %v1027, 1
      %v1066 = vrot.slane %v1033, 1
      %v1067 = vsel %vm726, %v1065, %v1066
      %1068 = vrot.lane.b32.xlu0 %v1064, 8
      %v1069 = vpop.permute.xlu0 %1068
      %1070 = vrot.lane.b32.xlu0 %v1067, 8
      %v1071 = vpop.permute.xlu0 %1070
      %v1073 = vsel %vm807, %v1026, %v1059
      %v1075 = vsel %vm807, %v1027, %v1061
      %v1077 = vsel %vm840, %v1073, %v1069
      %v1079 = vsel %vm840, %v1075, %v1071
      %v1082 = vunpack.c.l.b16 %v1077
      %v1083 = vunpack.c.h.b16 %v1077
      %v1084 = vunpack.c.l.b16 %v1079
      %v1085 = vunpack.c.h.b16 %v1079
      %v1086 = vpack.c.b16 %v1082, %v1082
      %v1087 = vpack.c.b16 %v1083, %v1083
      %v1088 = vpack.c.b16 %v1084, %v1084
      %v1089 = vpack.c.b16 %v1085, %v1085
      %1094 = vst.msk [vmem:[#allocation2 + $0x80] sm:$0xf] %vm985, %v1086
      %1095 = vst.msk [vmem:[#allocation2 + $0x84] sm:$0xf] %vm985, %v1087
      %1096 = vst.msk [vmem:[#allocation2 + $0x88] sm:$0xf] %vm985, %v1088
      %1097 = vst.msk [vmem:[#allocation2 + $0x8c] sm:$0xf] %vm985, %v1089
      %v1098 = vld [vmem:[%s3] sm:$0x1]
      %v1099 = vld [vmem:[%s2] sm:$0xf]
      %v1100 = vld [vmem:[%s2 + $0x4] sm:$0x3]
      %s1101 = scalar_lea.vmem %s2, 8
      %v1102 = vld [vmem:[%s1101] sm:$0xf]
      %v1103 = vld [vmem:[%s1101 + $0x4] sm:$0x3]
      %s1104 = scalar_lea.vmem %s2, 16
      %v1105 = vld [vmem:[%s1104] sm:$0xf]
      %v1106 = vld [vmem:[%s1104 + $0x4] sm:$0x3]
      %v1107 = vld [vmem:[#allocation2] sm:$0xf]
      %v1108 = vld [vmem:[#allocation2 + $0x4] sm:$0xf]
      %v1109 = vld [vmem:[#allocation2 + $0x8] sm:$0xf]
      %v1110 = vld [vmem:[#allocation2 + $0xc] sm:$0xf]
      %v1111 = vld [vmem:[#allocation2 + $0x10] sm:$0xf]
      %v1112 = vld [vmem:[#allocation2 + $0x14] sm:$0xf]
      %v1113 = vld [vmem:[#allocation2 + $0x18] sm:$0xf]
      %v1114 = vld [vmem:[#allocation2 + $0x1c] sm:$0xf]
      %v1115 = vld [vmem:[#allocation2 + $0x20] sm:$0xf]
      %v1116 = vld [vmem:[#allocation2 + $0x24] sm:$0xf]
      %v1117 = vld [vmem:[#allocation2 + $0x28] sm:$0xf]
      %v1118 = vld [vmem:[#allocation2 + $0x2c] sm:$0xf]
      %v1119 = vld [vmem:[#allocation2 + $0x30] sm:$0xf]
      %v1120 = vld [vmem:[#allocation2 + $0x34] sm:$0xf]
      %v1121 = vld [vmem:[#allocation2 + $0x38] sm:$0xf]
      %v1122 = vld [vmem:[#allocation2 + $0x3c] sm:$0xf]
      %v1123 = vld [vmem:[#allocation2 + $0x40] sm:$0xf]
      %v1124 = vld [vmem:[#allocation2 + $0x44] sm:$0xf]
      %v1125 = vld [vmem:[#allocation2 + $0x48] sm:$0xf]
      %v1126 = vld [vmem:[#allocation2 + $0x4c] sm:$0xf]
      %v1127 = vld [vmem:[#allocation2 + $0x50] sm:$0xf]
      %v1128 = vld [vmem:[#allocation2 + $0x54] sm:$0xf]
      %v1129 = vld [vmem:[#allocation2 + $0x58] sm:$0xf]
      %v1130 = vld [vmem:[#allocation2 + $0x5c] sm:$0xf]
      %v1131 = vld [vmem:[#allocation2 + $0x60] sm:$0xf]
      %v1132 = vld [vmem:[#allocation2 + $0x64] sm:$0xf]
      %v1133 = vld [vmem:[#allocation2 + $0x68] sm:$0xf]
      %v1134 = vld [vmem:[#allocation2 + $0x6c] sm:$0xf]
      %v1135 = vld [vmem:[#allocation2 + $0x70] sm:$0xf]
      %v1136 = vld [vmem:[#allocation2 + $0x74] sm:$0xf]
      %v1137 = vld [vmem:[#allocation2 + $0x78] sm:$0xf]
      %v1138 = vld [vmem:[#allocation2 + $0x7c] sm:$0xf]
      %s1139 = sadd.s32 0, 16
      %s1140 = sshra.s32 %s1139, 3
      %s1141 = sand.u32 %s1139, 7
      %s1142 = smul.addr %s1140, 4
      %s1143 = scalar_lea.vmem [#allocation2], %s1142
      %v1144 = vld [vmem:[%s1143] sm:$0xf]
      %v1145 = vld [vmem:[%s1143 + $0x4] sm:$0xf]
      %v1146 = vld [vmem:[%s1143 + $0x8] sm:$0xf]
      %v1147 = vld [vmem:[%s1143 + $0xc] sm:$0xf]
      %v1148 = vld [vmem:[%s1143 + $0x10] sm:$0xf]
      %v1149 = vld [vmem:[%s1143 + $0x14] sm:$0xf]
      %v1150 = vld [vmem:[%s1143 + $0x18] sm:$0xf]
      %v1151 = vld [vmem:[%s1143 + $0x1c] sm:$0xf]
      %v1152 = vld [vmem:[%s1143 + $0x20] sm:$0xf]
      %v1153 = vld [vmem:[%s1143 + $0x24] sm:$0xf]
      %v1154 = vld [vmem:[%s1143 + $0x28] sm:$0xf]
      %v1155 = vld [vmem:[%s1143 + $0x2c] sm:$0xf]
      %v1156 = vld [vmem:[%s1143 + $0x30] sm:$0xf]
      %v1157 = vld [vmem:[%s1143 + $0x34] sm:$0xf]
      %v1158 = vld [vmem:[%s1143 + $0x38] sm:$0xf]
      %v1159 = vld [vmem:[%s1143 + $0x3c] sm:$0xf]
      %v1160 = vld [vmem:[%s1143 + $0x40] sm:$0xf]
      %v1161 = vld [vmem:[%s1143 + $0x44] sm:$0xf]
      %v1162 = vld [vmem:[%s1143 + $0x48] sm:$0xf]
      %v1163 = vld [vmem:[%s1143 + $0x4c] sm:$0xf]
      %v1164 = vld [vmem:[%s1143 + $0x50] sm:$0xf]
      %v1165 = vld [vmem:[%s1143 + $0x54] sm:$0xf]
      %v1166 = vld [vmem:[%s1143 + $0x58] sm:$0xf]
      %v1167 = vld [vmem:[%s1143 + $0x5c] sm:$0xf]
      %v1168 = vld [vmem:[%s1143 + $0x60] sm:$0xf]
      %v1169 = vld [vmem:[%s1143 + $0x64] sm:$0xf]
      %v1170 = vld [vmem:[%s1143 + $0x68] sm:$0xf]
      %v1171 = vld [vmem:[%s1143 + $0x6c] sm:$0xf]
      %v1172 = vld [vmem:[%s1143 + $0x70] sm:$0xf]
      %v1173 = vld [vmem:[%s1143 + $0x74] sm:$0xf]
      %v1174 = vld [vmem:[%s1143 + $0x78] sm:$0xf]
      %v1175 = vld [vmem:[%s1143 + $0x7c] sm:$0xf]
      %v1208 = vunpack.c.l.b16 %v1144
      %v1209 = vunpack.c.l.b16 %v1145
      %v1210 = vunpack.c.l.b16 %v1146
      %v1211 = vunpack.c.l.b16 %v1147
      %v1212 = vunpack.c.l.b16 %v1148
      %v1213 = vunpack.c.l.b16 %v1149
      %v1214 = vunpack.c.l.b16 %v1150
      %v1215 = vunpack.c.l.b16 %v1151
      %v1216 = vunpack.c.l.b16 %v1152
      %v1217 = vunpack.c.l.b16 %v1153
      %v1218 = vunpack.c.l.b16 %v1154
      %v1219 = vunpack.c.l.b16 %v1155
      %v1220 = vunpack.c.l.b16 %v1156
      %v1221 = vunpack.c.l.b16 %v1157
      %v1222 = vunpack.c.l.b16 %v1158
      %v1223 = vunpack.c.l.b16 %v1159
      %v1224 = vunpack.c.l.b16 %v1160
      %v1225 = vunpack.c.l.b16 %v1161
      %v1226 = vunpack.c.l.b16 %v1162
      %v1227 = vunpack.c.l.b16 %v1163
      %v1228 = vunpack.c.l.b16 %v1164
      %v1229 = vunpack.c.l.b16 %v1165
      %v1230 = vunpack.c.l.b16 %v1166
      %v1231 = vunpack.c.l.b16 %v1167
      %v1232 = vunpack.c.l.b16 %v1168
      %v1233 = vunpack.c.l.b16 %v1169
      %v1234 = vunpack.c.l.b16 %v1170
      %v1235 = vunpack.c.l.b16 %v1171
      %v1236 = vunpack.c.l.b16 %v1172
      %v1237 = vunpack.c.l.b16 %v1173
      %v1238 = vunpack.c.l.b16 %v1174
      %v1239 = vunpack.c.l.b16 %v1175
      %v1240 = vpack.c.b16 %v1209, %v1208
      %v1241 = vpack.c.b16 %v1211, %v1210
      %v1242 = vpack.c.b16 %v1213, %v1212
      %v1243 = vpack.c.b16 %v1215, %v1214
      %v1244 = vpack.c.b16 %v1217, %v1216
      %v1245 = vpack.c.b16 %v1219, %v1218
      %v1246 = vpack.c.b16 %v1221, %v1220
      %v1247 = vpack.c.b16 %v1223, %v1222
      %v1248 = vpack.c.b16 %v1225, %v1224
      %v1249 = vpack.c.b16 %v1227, %v1226
      %v1250 = vpack.c.b16 %v1229, %v1228
      %v1251 = vpack.c.b16 %v1231, %v1230
      %v1252 = vpack.c.b16 %v1233, %v1232
      %v1253 = vpack.c.b16 %v1235, %v1234
      %v1254 = vpack.c.b16 %v1237, %v1236
      %v1255 = vpack.c.b16 %v1239, %v1238
      %v1258 = vunpack.c.l.b16 %v1102
      %v1259 = vunpack.c.l.b16 %v1103
      %v1260 = vpack.c.b16 %v1259, %v1258
      %vm1261 = vcmask 97280
      %v1263 = vsel %vm1261, %v1240, 0
      %v1266 = vsel %vm1261, %v1241, 0
      %v1269 = vsel %vm1261, %v1242, 0
      %v1272 = vsel %vm1261, %v1243, 0
      %v1275 = vsel %vm1261, %v1244, 0
      %v1278 = vsel %vm1261, %v1245, 0
      %v1281 = vsel %vm1261, %v1246, 0
      %v1284 = vsel %vm1261, %v1247, 0
      %v1287 = vsel %vm1261, %v1248, 0
      %v1290 = vsel %vm1261, %v1249, 0
      %v1293 = vsel %vm1261, %v1250, 0
      %v1296 = vsel %vm1261, %v1251, 0
      %v1299 = vsel %vm1261, %v1252, 0
      %v1302 = vsel %vm1261, %v1253, 0
      %v1305 = vsel %vm1261, %v1254, 0
      %v1308 = vsel %vm1261, %v1255, 0
      %vm1310 = vcmask 1045504
      %v1312 = vsel %vm1310, %v1260, 0
      %1314 = vmatpush.bf16.msra.mxu0 0
      %1315 = vmatpush.bf16.msra.mxu0 0
      %1316 = vmatpush.bf16.msra.mxu0 0
      %1317 = vmatpush.bf16.msra.mxu0 0
      %1318 = vmatpush.bf16.msra.mxu0 0
      %1319 = vmatpush.bf16.msra.mxu0 0
      %1320 = vmatpush.bf16.msra.mxu0 0
      %1321 = vmatpush.bf16.msra.mxu0 %v1312
      %1322 = vmatmul.bf16.gmra.mxu0 %v1263
      %v1323 = vpop.f32.mrf.mxu0
      %v1324 = vadd.f32 0.0, %v1323
      %v1325 = vpop.f32.mrf.mxu0
      %v1326 = vadd.f32 0.0, %v1325
      %1327 = vmatmul.bf16.gmra.mxu0 %v1266
      %v1328 = vpop.f32.mrf.mxu0
      %v1329 = vadd.f32 0.0, %v1328
      %v1330 = vpop.f32.mrf.mxu0
      %v1331 = vadd.f32 0.0, %v1330
      %1332 = vmatmul.bf16.gmra.mxu0 %v1269
      %v1333 = vpop.f32.mrf.mxu0
      %v1334 = vadd.f32 0.0, %v1333
      %v1335 = vpop.f32.mrf.mxu0
      %v1336 = vadd.f32 0.0, %v1335
      %1337 = vmatmul.bf16.gmra.mxu0 %v1272
      %v1338 = vpop.f32.mrf.mxu0
      %v1339 = vadd.f32 0.0, %v1338
      %v1340 = vpop.f32.mrf.mxu0
      %v1341 = vadd.f32 0.0, %v1340
      %1342 = vmatmul.bf16.gmra.mxu0 %v1275
      %v1343 = vpop.f32.mrf.mxu0
      %v1344 = vadd.f32 0.0, %v1343
      %v1345 = vpop.f32.mrf.mxu0
      %v1346 = vadd.f32 0.0, %v1345
      %1347 = vmatmul.bf16.gmra.mxu0 %v1278
      %v1348 = vpop.f32.mrf.mxu0
      %v1349 = vadd.f32 0.0, %v1348
      %v1350 = vpop.f32.mrf.mxu0
      %v1351 = vadd.f32 0.0, %v1350
      %1352 = vmatmul.bf16.gmra.mxu0 %v1281
      %v1353 = vpop.f32.mrf.mxu0
      %v1354 = vadd.f32 0.0, %v1353
      %v1355 = vpop.f32.mrf.mxu0
      %v1356 = vadd.f32 0.0, %v1355
      %1357 = vmatmul.bf16.gmra.mxu0 %v1284
      %v1358 = vpop.f32.mrf.mxu0
      %v1359 = vadd.f32 0.0, %v1358
      %v1360 = vpop.f32.mrf.mxu0
      %v1361 = vadd.f32 0.0, %v1360
      %1362 = vmatmul.bf16.gmra.mxu0 %v1287
      %v1363 = vpop.f32.mrf.mxu0
      %v1364 = vadd.f32 0.0, %v1363
      %v1365 = vpop.f32.mrf.mxu0
      %v1366 = vadd.f32 0.0, %v1365
      %1367 = vmatmul.bf16.gmra.mxu0 %v1290
      %v1368 = vpop.f32.mrf.mxu0
      %v1369 = vadd.f32 0.0, %v1368
      %v1370 = vpop.f32.mrf.mxu0
      %v1371 = vadd.f32 0.0, %v1370
      %1372 = vmatmul.bf16.gmra.mxu0 %v1293
      %v1373 = vpop.f32.mrf.mxu0
      %v1374 = vadd.f32 0.0, %v1373
      %v1375 = vpop.f32.mrf.mxu0
      %v1376 = vadd.f32 0.0, %v1375
      %1377 = vmatmul.bf16.gmra.mxu0 %v1296
      %v1378 = vpop.f32.mrf.mxu0
      %v1379 = vadd.f32 0.0, %v1378
      %v1380 = vpop.f32.mrf.mxu0
      %v1381 = vadd.f32 0.0, %v1380
      %1382 = vmatmul.bf16.gmra.mxu0 %v1299
      %v1383 = vpop.f32.mrf.mxu0
      %v1384 = vadd.f32 0.0, %v1383
      %v1385 = vpop.f32.mrf.mxu0
      %v1386 = vadd.f32 0.0, %v1385
      %1387 = vmatmul.bf16.gmra.mxu0 %v1302
      %v1388 = vpop.f32.mrf.mxu0
      %v1389 = vadd.f32 0.0, %v1388
      %v1390 = vpop.f32.mrf.mxu0
      %v1391 = vadd.f32 0.0, %v1390
      %1392 = vmatmul.bf16.gmra.mxu0 %v1305
      %v1393 = vpop.f32.mrf.mxu0
      %v1394 = vadd.f32 0.0, %v1393
      %v1395 = vpop.f32.mrf.mxu0
      %v1396 = vadd.f32 0.0, %v1395
      %1397 = vmatmul.bf16.gmra.mxu0 %v1308
      %v1398 = vpop.f32.mrf.mxu0
      %v1399 = vadd.f32 0.0, %v1398
      %v1400 = vpop.f32.mrf.mxu0
      %v1401 = vadd.f32 0.0, %v1400
      %1402 = vdwg.mxu0
      %v1435 = vunpack.c.l.b16 %v1107
      %v1436 = vunpack.c.l.b16 %v1108
      %v1437 = vunpack.c.l.b16 %v1109
      %v1438 = vunpack.c.l.b16 %v1110
      %v1439 = vunpack.c.l.b16 %v1111
      %v1440 = vunpack.c.l.b16 %v1112
      %v1441 = vunpack.c.l.b16 %v1113
      %v1442 = vunpack.c.l.b16 %v1114
      %v1443 = vunpack.c.l.b16 %v1115
      %v1444 = vunpack.c.l.b16 %v1116
      %v1445 = vunpack.c.l.b16 %v1117
      %v1446 = vunpack.c.l.b16 %v1118
      %v1447 = vunpack.c.l.b16 %v1119
      %v1448 = vunpack.c.l.b16 %v1120
      %v1449 = vunpack.c.l.b16 %v1121
      %v1450 = vunpack.c.l.b16 %v1122
      %v1451 = vunpack.c.l.b16 %v1123
      %v1452 = vunpack.c.l.b16 %v1124
      %v1453 = vunpack.c.l.b16 %v1125
      %v1454 = vunpack.c.l.b16 %v1126
      %v1455 = vunpack.c.l.b16 %v1127
      %v1456 = vunpack.c.l.b16 %v1128
      %v1457 = vunpack.c.l.b16 %v1129
      %v1458 = vunpack.c.l.b16 %v1130
      %v1459 = vunpack.c.l.b16 %v1131
      %v1460 = vunpack.c.l.b16 %v1132
      %v1461 = vunpack.c.l.b16 %v1133
      %v1462 = vunpack.c.l.b16 %v1134
      %v1463 = vunpack.c.l.b16 %v1135
      %v1464 = vunpack.c.l.b16 %v1136
      %v1465 = vunpack.c.l.b16 %v1137
      %v1466 = vunpack.c.l.b16 %v1138
      %v1467 = vpack.c.b16 %v1436, %v1435
      %v1468 = vpack.c.b16 %v1438, %v1437
      %v1469 = vpack.c.b16 %v1440, %v1439
      %v1470 = vpack.c.b16 %v1442, %v1441
      %v1471 = vpack.c.b16 %v1444, %v1443
      %v1472 = vpack.c.b16 %v1446, %v1445
      %v1473 = vpack.c.b16 %v1448, %v1447
      %v1474 = vpack.c.b16 %v1450, %v1449
      %v1475 = vpack.c.b16 %v1452, %v1451
      %v1476 = vpack.c.b16 %v1454, %v1453
      %v1477 = vpack.c.b16 %v1456, %v1455
      %v1478 = vpack.c.b16 %v1458, %v1457
      %v1479 = vpack.c.b16 %v1460, %v1459
      %v1480 = vpack.c.b16 %v1462, %v1461
      %v1481 = vpack.c.b16 %v1464, %v1463
      %v1482 = vpack.c.b16 %v1466, %v1465
      %v1485 = vunpack.c.l.b16 %v1099
      %v1486 = vunpack.c.l.b16 %v1100
      %v1487 = vpack.c.b16 %v1486, %v1485
      %v1489 = vsel %vm1261, %v1467, 0
      %v1492 = vsel %vm1261, %v1468, 0
      %v1495 = vsel %vm1261, %v1469, 0
      %v1498 = vsel %vm1261, %v1470, 0
      %v1501 = vsel %vm1261, %v1471, 0
      %v1504 = vsel %vm1261, %v1472, 0
      %v1507 = vsel %vm1261, %v1473, 0
      %v1510 = vsel %vm1261, %v1474, 0
      %v1513 = vsel %vm1261, %v1475, 0
      %v1516 = vsel %vm1261, %v1476, 0
      %v1519 = vsel %vm1261, %v1477, 0
      %v1522 = vsel %vm1261, %v1478, 0
      %v1525 = vsel %vm1261, %v1479, 0
      %v1528 = vsel %vm1261, %v1480, 0
      %v1531 = vsel %vm1261, %v1481, 0
      %v1534 = vsel %vm1261, %v1482, 0
      %v1537 = vsel %vm1310, %v1487, 0
      %1539 = vmatpush.bf16.msra.mxu0 0
      %1540 = vmatpush.bf16.msra.mxu0 0
      %1541 = vmatpush.bf16.msra.mxu0 0
      %1542 = vmatpush.bf16.msra.mxu0 0
      %1543 = vmatpush.bf16.msra.mxu0 0
      %1544 = vmatpush.bf16.msra.mxu0 0
      %1545 = vmatpush.bf16.msra.mxu0 0
      %1546 = vmatpush.bf16.msra.mxu0 %v1537
      %1547 = vmatmul.bf16.gmra.mxu0 %v1489
      %v1548 = vpop.f32.mrf.mxu0
      %v1549 = vadd.f32 %v1324, %v1548
      %v1550 = vpop.f32.mrf.mxu0
      %v1551 = vadd.f32 %v1326, %v1550
      %1552 = vmatmul.bf16.gmra.mxu0 %v1492
      %v1553 = vpop.f32.mrf.mxu0
      %v1554 = vadd.f32 %v1329, %v1553
      %v1555 = vpop.f32.mrf.mxu0
      %v1556 = vadd.f32 %v1331, %v1555
      %1557 = vmatmul.bf16.gmra.mxu0 %v1495
      %v1558 = vpop.f32.mrf.mxu0
      %v1559 = vadd.f32 %v1334, %v1558
      %v1560 = vpop.f32.mrf.mxu0
      %v1561 = vadd.f32 %v1336, %v1560
      %1562 = vmatmul.bf16.gmra.mxu0 %v1498
      %v1563 = vpop.f32.mrf.mxu0
      %v1564 = vadd.f32 %v1339, %v1563
      %v1565 = vpop.f32.mrf.mxu0
      %v1566 = vadd.f32 %v1341, %v1565
      %1567 = vmatmul.bf16.gmra.mxu0 %v1501
      %v1568 = vpop.f32.mrf.mxu0
      %v1569 = vadd.f32 %v1344, %v1568
      %v1570 = vpop.f32.mrf.mxu0
      %v1571 = vadd.f32 %v1346, %v1570
      %1572 = vmatmul.bf16.gmra.mxu0 %v1504
      %v1573 = vpop.f32.mrf.mxu0
      %v1574 = vadd.f32 %v1349, %v1573
      %v1575 = vpop.f32.mrf.mxu0
      %v1576 = vadd.f32 %v1351, %v1575
      %1577 = vmatmul.bf16.gmra.mxu0 %v1507
      %v1578 = vpop.f32.mrf.mxu0
      %v1579 = vadd.f32 %v1354, %v1578
      %v1580 = vpop.f32.mrf.mxu0
      %v1581 = vadd.f32 %v1356, %v1580
      %1582 = vmatmul.bf16.gmra.mxu0 %v1510
      %v1583 = vpop.f32.mrf.mxu0
      %v1584 = vadd.f32 %v1359, %v1583
      %v1585 = vpop.f32.mrf.mxu0
      %v1586 = vadd.f32 %v1361, %v1585
      %1587 = vmatmul.bf16.gmra.mxu0 %v1513
      %v1588 = vpop.f32.mrf.mxu0
      %v1589 = vadd.f32 %v1364, %v1588
      %v1590 = vpop.f32.mrf.mxu0
      %v1591 = vadd.f32 %v1366, %v1590
      %1592 = vmatmul.bf16.gmra.mxu0 %v1516
      %v1593 = vpop.f32.mrf.mxu0
      %v1594 = vadd.f32 %v1369, %v1593
      %v1595 = vpop.f32.mrf.mxu0
      %v1596 = vadd.f32 %v1371, %v1595
      %1597 = vmatmul.bf16.gmra.mxu0 %v1519
      %v1598 = vpop.f32.mrf.mxu0
      %v1599 = vadd.f32 %v1374, %v1598
      %v1600 = vpop.f32.mrf.mxu0
      %v1601 = vadd.f32 %v1376, %v1600
      %1602 = vmatmul.bf16.gmra.mxu0 %v1522
      %v1603 = vpop.f32.mrf.mxu0
      %v1604 = vadd.f32 %v1379, %v1603
      %v1605 = vpop.f32.mrf.mxu0
      %v1606 = vadd.f32 %v1381, %v1605
      %1607 = vmatmul.bf16.gmra.mxu0 %v1525
      %v1608 = vpop.f32.mrf.mxu0
      %v1609 = vadd.f32 %v1384, %v1608
      %v1610 = vpop.f32.mrf.mxu0
      %v1611 = vadd.f32 %v1386, %v1610
      %1612 = vmatmul.bf16.gmra.mxu0 %v1528
      %v1613 = vpop.f32.mrf.mxu0
      %v1614 = vadd.f32 %v1389, %v1613
      %v1615 = vpop.f32.mrf.mxu0
      %v1616 = vadd.f32 %v1391, %v1615
      %1617 = vmatmul.bf16.gmra.mxu0 %v1531
      %v1618 = vpop.f32.mrf.mxu0
      %v1619 = vadd.f32 %v1394, %v1618
      %v1620 = vpop.f32.mrf.mxu0
      %v1621 = vadd.f32 %v1396, %v1620
      %1622 = vmatmul.bf16.gmra.mxu0 %v1534
      %v1623 = vpop.f32.mrf.mxu0
      %v1624 = vadd.f32 %v1399, %v1623
      %v1625 = vpop.f32.mrf.mxu0
      %v1626 = vadd.f32 %v1401, %v1625
      %1627 = vdwg.mxu0
      %s1628 = sadd.s32 0, 32
      %s1629 = sshra.s32 %s1628, 3
      %s1630 = sand.u32 %s1628, 7
      %s1631 = smul.addr %s1629, 4
      %s1632 = scalar_lea.vmem [#allocation2], %s1631
      %v1633 = vld [vmem:[%s1632] sm:$0xf]
      %v1634 = vld [vmem:[%s1632 + $0x4] sm:$0xf]
      %v1635 = vld [vmem:[%s1632 + $0x8] sm:$0xf]
      %v1636 = vld [vmem:[%s1632 + $0xc] sm:$0xf]
      %v1637 = vld [vmem:[%s1632 + $0x10] sm:$0xf]
      %v1638 = vld [vmem:[%s1632 + $0x14] sm:$0xf]
      %v1639 = vld [vmem:[%s1632 + $0x18] sm:$0xf]
      %v1640 = vld [vmem:[%s1632 + $0x1c] sm:$0xf]
      %v1641 = vld [vmem:[%s1632 + $0x20] sm:$0xf]
      %v1642 = vld [vmem:[%s1632 + $0x24] sm:$0xf]
      %v1643 = vld [vmem:[%s1632 + $0x28] sm:$0xf]
      %v1644 = vld [vmem:[%s1632 + $0x2c] sm:$0xf]
      %v1645 = vld [vmem:[%s1632 + $0x30] sm:$0xf]
      %v1646 = vld [vmem:[%s1632 + $0x34] sm:$0xf]
      %v1647 = vld [vmem:[%s1632 + $0x38] sm:$0xf]
      %v1648 = vld [vmem:[%s1632 + $0x3c] sm:$0xf]
      %v1649 = vld [vmem:[%s1632 + $0x40] sm:$0xf]
      %v1650 = vld [vmem:[%s1632 + $0x44] sm:$0xf]
      %v1651 = vld [vmem:[%s1632 + $0x48] sm:$0xf]
      %v1652 = vld [vmem:[%s1632 + $0x4c] sm:$0xf]
      %v1653 = vld [vmem:[%s1632 + $0x50] sm:$0xf]
      %v1654 = vld [vmem:[%s1632 + $0x54] sm:$0xf]
      %v1655 = vld [vmem:[%s1632 + $0x58] sm:$0xf]
      %v1656 = vld [vmem:[%s1632 + $0x5c] sm:$0xf]
      %v1657 = vld [vmem:[%s1632 + $0x60] sm:$0xf]
      %v1658 = vld [vmem:[%s1632 + $0x64] sm:$0xf]
      %v1659 = vld [vmem:[%s1632 + $0x68] sm:$0xf]
      %v1660 = vld [vmem:[%s1632 + $0x6c] sm:$0xf]
      %v1661 = vld [vmem:[%s1632 + $0x70] sm:$0xf]
      %v1662 = vld [vmem:[%s1632 + $0x74] sm:$0xf]
      %v1663 = vld [vmem:[%s1632 + $0x78] sm:$0xf]
      %v1664 = vld [vmem:[%s1632 + $0x7c] sm:$0xf]
      %v1697 = vunpack.c.l.b16 %v1633
      %v1698 = vunpack.c.l.b16 %v1634
      %v1699 = vunpack.c.l.b16 %v1635
      %v1700 = vunpack.c.l.b16 %v1636
      %v1701 = vunpack.c.l.b16 %v1637
      %v1702 = vunpack.c.l.b16 %v1638
      %v1703 = vunpack.c.l.b16 %v1639
      %v1704 = vunpack.c.l.b16 %v1640
      %v1705 = vunpack.c.l.b16 %v1641
      %v1706 = vunpack.c.l.b16 %v1642
      %v1707 = vunpack.c.l.b16 %v1643
      %v1708 = vunpack.c.l.b16 %v1644
      %v1709 = vunpack.c.l.b16 %v1645
      %v1710 = vunpack.c.l.b16 %v1646
      %v1711 = vunpack.c.l.b16 %v1647
      %v1712 = vunpack.c.l.b16 %v1648
      %v1713 = vunpack.c.l.b16 %v1649
      %v1714 = vunpack.c.l.b16 %v1650
      %v1715 = vunpack.c.l.b16 %v1651
      %v1716 = vunpack.c.l.b16 %v1652
      %v1717 = vunpack.c.l.b16 %v1653
      %v1718 = vunpack.c.l.b16 %v1654
      %v1719 = vunpack.c.l.b16 %v1655
      %v1720 = vunpack.c.l.b16 %v1656
      %v1721 = vunpack.c.l.b16 %v1657
      %v1722 = vunpack.c.l.b16 %v1658
      %v1723 = vunpack.c.l.b16 %v1659
      %v1724 = vunpack.c.l.b16 %v1660
      %v1725 = vunpack.c.l.b16 %v1661
      %v1726 = vunpack.c.l.b16 %v1662
      %v1727 = vunpack.c.l.b16 %v1663
      %v1728 = vunpack.c.l.b16 %v1664
      %v1729 = vpack.c.b16 %v1698, %v1697
      %v1730 = vpack.c.b16 %v1700, %v1699
      %v1731 = vpack.c.b16 %v1702, %v1701
      %v1732 = vpack.c.b16 %v1704, %v1703
      %v1733 = vpack.c.b16 %v1706, %v1705
      %v1734 = vpack.c.b16 %v1708, %v1707
      %v1735 = vpack.c.b16 %v1710, %v1709
      %v1736 = vpack.c.b16 %v1712, %v1711
      %v1737 = vpack.c.b16 %v1714, %v1713
      %v1738 = vpack.c.b16 %v1716, %v1715
      %v1739 = vpack.c.b16 %v1718, %v1717
      %v1740 = vpack.c.b16 %v1720, %v1719
      %v1741 = vpack.c.b16 %v1722, %v1721
      %v1742 = vpack.c.b16 %v1724, %v1723
      %v1743 = vpack.c.b16 %v1726, %v1725
      %v1744 = vpack.c.b16 %v1728, %v1727
      %v1747 = vunpack.c.l.b16 %v1105
      %v1748 = vunpack.c.l.b16 %v1106
      %v1749 = vpack.c.b16 %v1748, %v1747
      %v1751 = vsel %vm1261, %v1729, 0
      %v1754 = vsel %vm1261, %v1730, 0
      %v1757 = vsel %vm1261, %v1731, 0
      %v1760 = vsel %vm1261, %v1732, 0
      %v1763 = vsel %vm1261, %v1733, 0
      %v1766 = vsel %vm1261, %v1734, 0
      %v1769 = vsel %vm1261, %v1735, 0
      %v1772 = vsel %vm1261, %v1736, 0
      %v1775 = vsel %vm1261, %v1737, 0
      %v1778 = vsel %vm1261, %v1738, 0
      %v1781 = vsel %vm1261, %v1739, 0
      %v1784 = vsel %vm1261, %v1740, 0
      %v1787 = vsel %vm1261, %v1741, 0
      %v1790 = vsel %vm1261, %v1742, 0
      %v1793 = vsel %vm1261, %v1743, 0
      %v1796 = vsel %vm1261, %v1744, 0
      %v1799 = vsel %vm1310, %v1749, 0
      %1801 = vmatpush.bf16.msra.mxu0 0
      %1802 = vmatpush.bf16.msra.mxu0 0
      %1803 = vmatpush.bf16.msra.mxu0 0
      %1804 = vmatpush.bf16.msra.mxu0 0
      %1805 = vmatpush.bf16.msra.mxu0 0
      %1806 = vmatpush.bf16.msra.mxu0 0
      %1807 = vmatpush.bf16.msra.mxu0 0
      %1808 = vmatpush.bf16.msra.mxu0 %v1799
      %1809 = vmatmul.bf16.gmra.mxu0 %v1751
      %v1810 = vpop.f32.mrf.mxu0
      %v1811 = vadd.f32 0.0, %v1810
      %v1812 = vpop.f32.mrf.mxu0
      %v1813 = vadd.f32 0.0, %v1812
      %1814 = vmatmul.bf16.gmra.mxu0 %v1754
      %v1815 = vpop.f32.mrf.mxu0
      %v1816 = vadd.f32 0.0, %v1815
      %v1817 = vpop.f32.mrf.mxu0
      %v1818 = vadd.f32 0.0, %v1817
      %1819 = vmatmul.bf16.gmra.mxu0 %v1757
      %v1820 = vpop.f32.mrf.mxu0
      %v1821 = vadd.f32 0.0, %v1820
      %v1822 = vpop.f32.mrf.mxu0
      %v1823 = vadd.f32 0.0, %v1822
      %1824 = vmatmul.bf16.gmra.mxu0 %v1760
      %v1825 = vpop.f32.mrf.mxu0
      %v1826 = vadd.f32 0.0, %v1825
      %v1827 = vpop.f32.mrf.mxu0
      %v1828 = vadd.f32 0.0, %v1827
      %1829 = vmatmul.bf16.gmra.mxu0 %v1763
      %v1830 = vpop.f32.mrf.mxu0
      %v1831 = vadd.f32 0.0, %v1830
      %v1832 = vpop.f32.mrf.mxu0
      %v1833 = vadd.f32 0.0, %v1832
      %1834 = vmatmul.bf16.gmra.mxu0 %v1766
      %v1835 = vpop.f32.mrf.mxu0
      %v1836 = vadd.f32 0.0, %v1835
      %v1837 = vpop.f32.mrf.mxu0
      %v1838 = vadd.f32 0.0, %v1837
      %1839 = vmatmul.bf16.gmra.mxu0 %v1769
      %v1840 = vpop.f32.mrf.mxu0
      %v1841 = vadd.f32 0.0, %v1840
      %v1842 = vpop.f32.mrf.mxu0
      %v1843 = vadd.f32 0.0, %v1842
      %1844 = vmatmul.bf16.gmra.mxu0 %v1772
      %v1845 = vpop.f32.mrf.mxu0
      %v1846 = vadd.f32 0.0, %v1845
      %v1847 = vpop.f32.mrf.mxu0
      %v1848 = vadd.f32 0.0, %v1847
      %1849 = vmatmul.bf16.gmra.mxu0 %v1775
      %v1850 = vpop.f32.mrf.mxu0
      %v1851 = vadd.f32 0.0, %v1850
      %v1852 = vpop.f32.mrf.mxu0
      %v1853 = vadd.f32 0.0, %v1852
      %1854 = vmatmul.bf16.gmra.mxu0 %v1778
      %v1855 = vpop.f32.mrf.mxu0
      %v1856 = vadd.f32 0.0, %v1855
      %v1857 = vpop.f32.mrf.mxu0
      %v1858 = vadd.f32 0.0, %v1857
      %1859 = vmatmul.bf16.gmra.mxu0 %v1781
      %v1860 = vpop.f32.mrf.mxu0
      %v1861 = vadd.f32 0.0, %v1860
      %v1862 = vpop.f32.mrf.mxu0
      %v1863 = vadd.f32 0.0, %v1862
      %1864 = vmatmul.bf16.gmra.mxu0 %v1784
      %v1865 = vpop.f32.mrf.mxu0
      %v1866 = vadd.f32 0.0, %v1865
      %v1867 = vpop.f32.mrf.mxu0
      %v1868 = vadd.f32 0.0, %v1867
      %1869 = vmatmul.bf16.gmra.mxu0 %v1787
      %v1870 = vpop.f32.mrf.mxu0
      %v1871 = vadd.f32 0.0, %v1870
      %v1872 = vpop.f32.mrf.mxu0
      %v1873 = vadd.f32 0.0, %v1872
      %1874 = vmatmul.bf16.gmra.mxu0 %v1790
      %v1875 = vpop.f32.mrf.mxu0
      %v1876 = vadd.f32 0.0, %v1875
      %v1877 = vpop.f32.mrf.mxu0
      %v1878 = vadd.f32 0.0, %v1877
      %1879 = vmatmul.bf16.gmra.mxu0 %v1793
      %v1880 = vpop.f32.mrf.mxu0
      %v1881 = vadd.f32 0.0, %v1880
      %v1882 = vpop.f32.mrf.mxu0
      %v1883 = vadd.f32 0.0, %v1882
      %1884 = vmatmul.bf16.gmra.mxu0 %v1796
      %v1885 = vpop.f32.mrf.mxu0
      %v1886 = vadd.f32 0.0, %v1885
      %v1887 = vpop.f32.mrf.mxu0
      %v1888 = vadd.f32 0.0, %v1887
      %1889 = vdwg.mxu0
      %v1890 = vadd.f32 %v1549, %v1811
      %v1891 = vadd.f32 %v1551, %v1813
      %v1892 = vadd.f32 %v1554, %v1816
      %v1893 = vadd.f32 %v1556, %v1818
      %v1894 = vadd.f32 %v1559, %v1821
      %v1895 = vadd.f32 %v1561, %v1823
      %v1896 = vadd.f32 %v1564, %v1826
      %v1897 = vadd.f32 %v1566, %v1828
      %v1898 = vadd.f32 %v1569, %v1831
      %v1899 = vadd.f32 %v1571, %v1833
      %v1900 = vadd.f32 %v1574, %v1836
      %v1901 = vadd.f32 %v1576, %v1838
      %v1902 = vadd.f32 %v1579, %v1841
      %v1903 = vadd.f32 %v1581, %v1843
      %v1904 = vadd.f32 %v1584, %v1846
      %v1905 = vadd.f32 %v1586, %v1848
      %v1906 = vadd.f32 %v1589, %v1851
      %v1907 = vadd.f32 %v1591, %v1853
      %v1908 = vadd.f32 %v1594, %v1856
      %v1909 = vadd.f32 %v1596, %v1858
      %v1910 = vadd.f32 %v1599, %v1861
      %v1911 = vadd.f32 %v1601, %v1863
      %v1912 = vadd.f32 %v1604, %v1866
      %v1913 = vadd.f32 %v1606, %v1868
      %v1914 = vadd.f32 %v1609, %v1871
      %v1915 = vadd.f32 %v1611, %v1873
      %v1916 = vadd.f32 %v1614, %v1876
      %v1917 = vadd.f32 %v1616, %v1878
      %v1918 = vadd.f32 %v1619, %v1881
      %v1919 = vadd.f32 %v1621, %v1883
      %v1920 = vadd.f32 %v1624, %v1886
      %v1921 = vadd.f32 %v1626, %v1888
      %v1923 = vperm.slane %v1098, 0
      %v1925 = vadd.f32 %v1890, %v1923
      %v1926 = vadd.f32 %v1891, %v1923
      %v1927 = vadd.f32 %v1892, %v1923
      %v1928 = vadd.f32 %v1893, %v1923
      %v1929 = vadd.f32 %v1894, %v1923
      %v1930 = vadd.f32 %v1895, %v1923
      %v1931 = vadd.f32 %v1896, %v1923
      %v1932 = vadd.f32 %v1897, %v1923
      %v1933 = vadd.f32 %v1898, %v1923
      %v1934 = vadd.f32 %v1899, %v1923
      %v1935 = vadd.f32 %v1900, %v1923
      %v1936 = vadd.f32 %v1901, %v1923
      %v1937 = vadd.f32 %v1902, %v1923
      %v1938 = vadd.f32 %v1903, %v1923
      %v1939 = vadd.f32 %v1904, %v1923
      %v1940 = vadd.f32 %v1905, %v1923
      %v1941 = vadd.f32 %v1906, %v1923
      %v1942 = vadd.f32 %v1907, %v1923
      %v1943 = vadd.f32 %v1908, %v1923
      %v1944 = vadd.f32 %v1909, %v1923
      %v1945 = vadd.f32 %v1910, %v1923
      %v1946 = vadd.f32 %v1911, %v1923
      %v1947 = vadd.f32 %v1912, %v1923
      %v1948 = vadd.f32 %v1913, %v1923
      %v1949 = vadd.f32 %v1914, %v1923
      %v1950 = vadd.f32 %v1915, %v1923
      %v1951 = vadd.f32 %v1916, %v1923
      %v1952 = vadd.f32 %v1917, %v1923
      %v1953 = vadd.f32 %v1918, %v1923
      %v1954 = vadd.f32 %v1919, %v1923
      %v1955 = vadd.f32 %v1920, %v1923
      %v1956 = vadd.f32 %v1921, %v1923
      %v1957 = vmax.f32 %v1925, 0.0
      %v1958 = vmax.f32 %v1926, 0.0
      %v1959 = vmax.f32 %v1927, 0.0
      %v1960 = vmax.f32 %v1928, 0.0
      %v1961 = vmax.f32 %v1929, 0.0
      %v1962 = vmax.f32 %v1930, 0.0
      %v1963 = vmax.f32 %v1931, 0.0
      %v1964 = vmax.f32 %v1932, 0.0
      %v1965 = vmax.f32 %v1933, 0.0
      %v1966 = vmax.f32 %v1934, 0.0
      %v1967 = vmax.f32 %v1935, 0.0
      %v1968 = vmax.f32 %v1936, 0.0
      %v1969 = vmax.f32 %v1937, 0.0
      %v1970 = vmax.f32 %v1938, 0.0
      %v1971 = vmax.f32 %v1939, 0.0
      %v1972 = vmax.f32 %v1940, 0.0
      %v1973 = vmax.f32 %v1941, 0.0
      %v1974 = vmax.f32 %v1942, 0.0
      %v1975 = vmax.f32 %v1943, 0.0
      %v1976 = vmax.f32 %v1944, 0.0
      %v1977 = vmax.f32 %v1945, 0.0
      %v1978 = vmax.f32 %v1946, 0.0
      %v1979 = vmax.f32 %v1947, 0.0
      %v1980 = vmax.f32 %v1948, 0.0
      %v1981 = vmax.f32 %v1949, 0.0
      %v1982 = vmax.f32 %v1950, 0.0
      %v1983 = vmax.f32 %v1951, 0.0
      %v1984 = vmax.f32 %v1952, 0.0
      %v1985 = vmax.f32 %v1953, 0.0
      %v1986 = vmax.f32 %v1954, 0.0
      %v1987 = vmax.f32 %v1955, 0.0
      %v1988 = vmax.f32 %v1956, 0.0
      %v1989 = vpack.c.bf16 %v1957, %v1957
      %v1990 = vpack.c.bf16 %v1958, %v1958
      %v1991 = vpack.c.bf16 %v1959, %v1959
      %v1992 = vpack.c.bf16 %v1960, %v1960
      %v1993 = vpack.c.bf16 %v1961, %v1961
      %v1994 = vpack.c.bf16 %v1962, %v1962
      %v1995 = vpack.c.bf16 %v1963, %v1963
      %v1996 = vpack.c.bf16 %v1964, %v1964
      %v1997 = vpack.c.bf16 %v1965, %v1965
      %v1998 = vpack.c.bf16 %v1966, %v1966
      %v1999 = vpack.c.bf16 %v1967, %v1967
      %v2000 = vpack.c.bf16 %v1968, %v1968
      %v2001 = vpack.c.bf16 %v1969, %v1969
      %v2002 = vpack.c.bf16 %v1970, %v1970
      %v2003 = vpack.c.bf16 %v1971, %v1971
      %v2004 = vpack.c.bf16 %v1972, %v1972
      %v2005 = vpack.c.bf16 %v1973, %v1973
      %v2006 = vpack.c.bf16 %v1974, %v1974
      %v2007 = vpack.c.bf16 %v1975, %v1975
      %v2008 = vpack.c.bf16 %v1976, %v1976
      %v2009 = vpack.c.bf16 %v1977, %v1977
      %v2010 = vpack.c.bf16 %v1978, %v1978
      %v2011 = vpack.c.bf16 %v1979, %v1979
      %v2012 = vpack.c.bf16 %v1980, %v1980
      %v2013 = vpack.c.bf16 %v1981, %v1981
      %v2014 = vpack.c.bf16 %v1982, %v1982
      %v2015 = vpack.c.bf16 %v1983, %v1983
      %v2016 = vpack.c.bf16 %v1984, %v1984
      %v2017 = vpack.c.bf16 %v1985, %v1985
      %v2018 = vpack.c.bf16 %v1986, %v1986
      %v2019 = vpack.c.bf16 %v1987, %v1987
      %v2020 = vpack.c.bf16 %v1988, %v1988
      %vm2021 = vcmask 60416
      %2022 = vst.msk [vmem:[%s316] sm:$0xf] %vm2021, %v1989
      %2023 = vst.msk [vmem:[%s316 + $0x4] sm:$0xf] %vm2021, %v1990
      %2024 = vst.msk [vmem:[%s316 + $0x8] sm:$0xf] %vm2021, %v1991
      %2025 = vst.msk [vmem:[%s316 + $0xc] sm:$0xf] %vm2021, %v1992
      %2026 = vst.msk [vmem:[%s316 + $0x10] sm:$0xf] %vm2021, %v1993
      %2027 = vst.msk [vmem:[%s316 + $0x14] sm:$0xf] %vm2021, %v1994
      %2028 = vst.msk [vmem:[%s316 + $0x18] sm:$0xf] %vm2021, %v1995
      %2029 = vst.msk [vmem:[%s316 + $0x1c] sm:$0xf] %vm2021, %v1996
      %2030 = vst.msk [vmem:[%s316 + $0x20] sm:$0xf] %vm2021, %v1997
      %2031 = vst.msk [vmem:[%s316 + $0x24] sm:$0xf] %vm2021, %v1998
      %2032 = vst.msk [vmem:[%s316 + $0x28] sm:$0xf] %vm2021, %v1999
      %2033 = vst.msk [vmem:[%s316 + $0x2c] sm:$0xf] %vm2021, %v2000
      %2034 = vst.msk [vmem:[%s316 + $0x30] sm:$0xf] %vm2021, %v2001
      %2035 = vst.msk [vmem:[%s316 + $0x34] sm:$0xf] %vm2021, %v2002
      %2036 = vst.msk [vmem:[%s316 + $0x38] sm:$0xf] %vm2021, %v2003
      %2037 = vst.msk [vmem:[%s316 + $0x3c] sm:$0xf] %vm2021, %v2004
      %2038 = vst.msk [vmem:[%s316 + $0x40] sm:$0xf] %vm2021, %v2005
      %2039 = vst.msk [vmem:[%s316 + $0x44] sm:$0xf] %vm2021, %v2006
      %2040 = vst.msk [vmem:[%s316 + $0x48] sm:$0xf] %vm2021, %v2007
      %2041 = vst.msk [vmem:[%s316 + $0x4c] sm:$0xf] %vm2021, %v2008
      %2042 = vst.msk [vmem:[%s316 + $0x50] sm:$0xf] %vm2021, %v2009
      %2043 = vst.msk [vmem:[%s316 + $0x54] sm:$0xf] %vm2021, %v2010
      %2044 = vst.msk [vmem:[%s316 + $0x58] sm:$0xf] %vm2021, %v2011
      %2045 = vst.msk [vmem:[%s316 + $0x5c] sm:$0xf] %vm2021, %v2012
      %2046 = vst.msk [vmem:[%s316 + $0x60] sm:$0xf] %vm2021, %v2013
      %2047 = vst.msk [vmem:[%s316 + $0x64] sm:$0xf] %vm2021, %v2014
      %2048 = vst.msk [vmem:[%s316 + $0x68] sm:$0xf] %vm2021, %v2015
      %2049 = vst.msk [vmem:[%s316 + $0x6c] sm:$0xf] %vm2021, %v2016
      %2050 = vst.msk [vmem:[%s316 + $0x70] sm:$0xf] %vm2021, %v2017
      %2051 = vst.msk [vmem:[%s316 + $0x74] sm:$0xf] %vm2021, %v2018
      %2052 = vst.msk [vmem:[%s316 + $0x78] sm:$0xf] %vm2021, %v2019
      %2053 = vst.msk [vmem:[%s316 + $0x7c] sm:$0xf] %vm2021, %v2020
      %s2054 = smul.u32 32, %s20
      %p2055 = scmp.lt.s32.totalorder %s19, 1
      %s2056 = scalar_select %p2055, %s19, 1
      %p2057 = scmp.lt.s32.totalorder %s2054, 31
      %s2058 = scalar_select %p2057, %s2054, 31
      %s2059 = smul.addr %s2056, 32
      %s2060 = sadd.s32 %s2058, %s2059
      %s2061 = smul.addr %s2060, 4
      %s2062 = scalar_lea.vmem %s4, %s2061
      // Predicated region
      $region37: #{_conv3x3_bn_relu.1} parent=35 // pred_check
        %p2063 = pneg %p149
      $region38: #{_conv3x3_bn_relu.1} parent=35 // pred_check_branch
        %2065 = sbr.rel (%p2063) target = $region40
      $region39: #{_conv3x3_bn_relu.1} parent=35 // pred_region
        %s2066 = smul.u32 32, %s20
      $region40: #{_conv3x3_bn_relu.1} parent=35 // pred_fallthru
        _
    $region36: #{_conv3x3_bn_relu.1} parent=5 // pred_fallthru
      _
    %p2067 = scmp.le.s32.totalorder 2, %s10
    // Predicated region
    $region41: #{_conv3x3_bn_relu.1} parent=5 // pred_check
      %p2068 = pneg %p2067
    $region42: #{_conv3x3_bn_relu.1} parent=5 // pred_check_branch
      %2070 = sbr.rel (%p2068) target = $region44
    $region43: #{_conv3x3_bn_relu.1} parent=5 // pred_region
      %s2071 = ssub.s32 %s10, 2
      // Predicated region
      $region45: #{_conv3x3_bn_relu.1} parent=43 // pred_check
        %p2072 = pneg %p155
      $region46: #{_conv3x3_bn_relu.1} parent=43 // pred_check_branch
        %2074 = sbr.rel (%p2072) target = $region48
      $region47: #{_conv3x3_bn_relu.1} parent=43 // pred_region
        %s2075 = smul.u32 32, %s22
        %p2076 = scmp.lt.s32.totalorder %s21, 1
        %s2077 = scalar_select %p2076, %s21, 1
        %p2078 = scmp.lt.s32.totalorder %s2075, 31
        %s2079 = scalar_select %p2078, %s2075, 31
        %s2080 = smul.addr %s2077, 32
        %s2081 = sadd.s32 %s2079, %s2080
        %s2082 = smul.addr %s2081, 4
        %s2083 = scalar_lea.vmem %s4, %s2082
      $region48: #{_conv3x3_bn_relu.1} parent=43 // pred_fallthru
        _
    $region44: #{_conv3x3_bn_relu.1} parent=5 // pred_fallthru
      _
  $region6: #{_conv3x3_bn_relu.1} parent=0 // loop_footer
    %s14 = sadd.s32 1, %s10
  $region7: #{_conv3x3_bn_relu.1} parent=0 // loop_footer_branch
    %9 = sbr.rel target = $region3
  $region8: #{_conv3x3_bn_relu.1} parent=0 // loop_exit
    _

</llo_original>
